<compile_context>
chip_gen: v5e
topology: v5e:2x2
jax: 0.10.0
libtpu: 0.0.40
codegen_flags: <defaults>
</compile_context>

<pallas_src>
import functools

import jax
import jax.numpy as jnp
from jax.experimental import pallas as pl
from jax.experimental.pallas import tpu as pltpu


TILE_B = 128   # batch rows per grid step (multiple of 8; 128 fills MXU rows)
K_PAD = 128    # hidden dim padded to a lane multiple


def autoencoder_kernel(x_ref, wg_ref, bg_ref, wh_ref, bh_ref, o_ref):
    """Fused forward: two MXU matmuls + bias + sigmoid, all VMEM-resident."""
    x = x_ref[...]                                                 # (tB, Q) bf16
    # hidden = sigmoid(x @ Wg^T + bg)   -- f32 accumulate
    hid = jnp.dot(x, wg_ref[...], preferred_element_type=jnp.float32)
    hid = jax.nn.sigmoid(hid + bg_ref[...])                        # (tB, Kp) f32
    # out = sigmoid(hid @ Wh^T + bh)    -- bf16 operands, f32 accumulate
    out = jnp.dot(hid.astype(jnp.bfloat16), wh_ref[...],
                  preferred_element_type=jnp.float32)
    out = jax.nn.sigmoid(out + bh_ref[...])                        # (tB, Q) f32
    o_ref[...] = out.astype(o_ref.dtype)


def prepare_params(g_weight, g_bias, h_weight, h_bias, k_pad=K_PAD):
    """One-time parameter prep: transpose, zero-pad hidden dim, cast to bf16.

    g_weight : (k, Q)  PyTorch nn.Linear layout     -> Wg^T (Q, k_pad) bf16
    g_bias   : (k,)                                 -> bg   (1, k_pad) f32
    h_weight : (Q, k)                               -> Wh^T (k_pad, Q) bf16
    h_bias   : (Q,)                                 -> bh   (1, Q)     f32
    Extra Wh^T rows are zero so the padded hidden units (sigmoid(0)=0.5)
    contribute nothing to the output.
    """
    K, Q = g_weight.shape
    wg_t = jnp.zeros((Q, k_pad), jnp.bfloat16).at[:, :K].set(
        jnp.transpose(g_weight).astype(jnp.bfloat16))
    bg = jnp.zeros((1, k_pad), jnp.float32).at[:, :K].set(
        g_bias.astype(jnp.float32))
    wh_t = jnp.zeros((k_pad, Q), jnp.bfloat16).at[:K, :].set(
        jnp.transpose(h_weight).astype(jnp.bfloat16))
    bh = h_bias.reshape(1, Q).astype(jnp.float32)
    return wg_t, bg, wh_t, bh


@functools.partial(jax.jit, static_argnames=("tile_b",))
def autoencoder_forward(x, wg_t, bg, wh_t, bh, tile_b=TILE_B):
    """Pallas forward pass.

    x     : (B, Q) float  -- user vectors
    wg_t  : (Q, Kp) bf16, bg: (1, Kp) f32
    wh_t  : (Kp, Q) bf16, bh: (1, Q)  f32
    returns (B, Q) float32
    """
    B, Q = x.shape
    Kp = wg_t.shape[1]

    # Pad batch up to a multiple of the tile so the grid covers it exactly.
    b_pad = pl.cdiv(B, tile_b) * tile_b
    xb = x.astype(jnp.bfloat16)
    if b_pad != B:
        xb = jnp.pad(xb, ((0, b_pad - B), (0, 0)))

    out = pl.pallas_call(
        autoencoder_kernel,
        out_shape=jax.ShapeDtypeStruct((b_pad, Q), jnp.float32),
        grid=(b_pad // tile_b,),
        in_specs=[
            pl.BlockSpec((tile_b, Q), lambda b: (b, 0)),   # x tile walks batch
            pl.BlockSpec((Q, Kp), lambda b: (0, 0)),       # Wg^T  (resident)
            pl.BlockSpec((1, Kp), lambda b: (0, 0)),       # bg    (resident)
            pl.BlockSpec((Kp, Q), lambda b: (0, 0)),       # Wh^T  (resident)
            pl.BlockSpec((1, Q), lambda b: (0, 0)),        # bh    (resident)
        ],
        out_specs=pl.BlockSpec((tile_b, Q), lambda b: (b, 0)),
        compiler_params=pltpu.CompilerParams(
            dimension_semantics=("parallel",)),            # shard over TCs
    )(xb, wg_t, bg, wh_t, bh)

    if b_pad != B:
        out = out[:B]
    return out


def init_params(key, num_question, k=100):
    """nn.Linear-style init: U(-1/sqrt(fan_in), +1/sqrt(fan_in)), f32."""
    kg_w, kg_b, kh_w, kh_b = jax.random.split(key, 4)
    bound_g = 1.0 / jnp.sqrt(num_question)
    bound_h = 1.0 / jnp.sqrt(k)
    g_weight = jax.random.uniform(kg_w, (k, num_question), jnp.float32,
                                  minval=-bound_g, maxval=bound_g)
    g_bias = jax.random.uniform(kg_b, (k,), jnp.float32,
                                minval=-bound_g, maxval=bound_g)
    h_weight = jax.random.uniform(kh_w, (num_question, k), jnp.float32,
                                  minval=-bound_h, maxval=bound_h)
    h_bias = jax.random.uniform(kh_b, (num_question,), jnp.float32,
                                minval=-bound_h, maxval=bound_h)
    return g_weight, g_bias, h_weight, h_bias


if __name__ == "__main__":
    key = jax.random.PRNGKey(0)
    k_in, k_params = jax.random.split(key)

    batch = 256           # many users per call amortizes launch/weight DMA
    num_question = 256
    k = 100               # AutoEncoder default hidden size

    x = jax.random.uniform(k_in, (batch, num_question), jnp.float32)
    g_weight, g_bias, h_weight, h_bias = init_params(k_params, num_question, k)

    # One-time parameter preparation (hoisted out of the per-call path).
    wg_t, bg, wh_t, bh = prepare_params(g_weight, g_bias, h_weight, h_bias)

    out = autoencoder_forward(x, wg_t, bg, wh_t, bh)
    out = jax.block_until_ready(out)

    # Pure-JAX f32 reference (same semantics as the PyTorch forward).
    ref = jax.nn.sigmoid(
        jax.nn.sigmoid(x @ g_weight.T + g_bias) @ h_weight.T + h_bias)

    assert out.shape == (batch, num_question)
    # bf16 MXU operands => relax tolerance vs. the f32 reference.
    assert jnp.allclose(out, ref, atol=1e-2, rtol=1e-2), (
        float(jnp.max(jnp.abs(out - ref))))

    print("KERNEL_OK")
</pallas_src>

<mosaic_0001>
module attributes {stable_mosaic.version = 11 : i64} {
  func.func @autoencoder_kernel(%arg0: i32, %arg1: memref<128x256xbf16, #tpu.memory_space<vmem>>, %arg2: memref<256x128xbf16, #tpu.memory_space<vmem>>, %arg3: memref<1x128xf32, #tpu.memory_space<vmem>>, %arg4: memref<128x256xbf16, #tpu.memory_space<vmem>>, %arg5: memref<1x256xf32, #tpu.memory_space<vmem>>, %arg6: memref<128x256xf32, #tpu.memory_space<vmem>>) attributes {dimension_semantics = [#tpu.dimension_semantics<parallel>], iteration_bounds = array<i64: 2>, scalar_prefetch = 0 : i64, scratch_operands = 0 : i64, tpu.core_type = #tpu.core_type<tc>, window_params = [{transform_indices = @transform_0, window_bounds = array<i64: 128, 256>}, {pipeline_mode = #tpu.pipeline_mode<synchronous>, transform_indices = @transform_1, window_bounds = array<i64: 256, 128>}, {pipeline_mode = #tpu.pipeline_mode<synchronous>, transform_indices = @transform_2, window_bounds = array<i64: 1, 128>}, {pipeline_mode = #tpu.pipeline_mode<synchronous>, transform_indices = @transform_3, window_bounds = array<i64: 128, 256>}, {pipeline_mode = #tpu.pipeline_mode<synchronous>, transform_indices = @transform_4, window_bounds = array<i64: 1, 256>}, {transform_indices = @transform_5, window_bounds = array<i64: 128, 256>}]} {
    %c0 = arith.constant 0 : index
    %c0_0 = arith.constant 0 : index
    %0 = vector.load %arg1[%c0, %c0_0] : memref<128x256xbf16, #tpu.memory_space<vmem>>, vector<128x256xbf16>
    %c0_1 = arith.constant 0 : index
    %c0_2 = arith.constant 0 : index
    %1 = vector.load %arg2[%c0_1, %c0_2] : memref<256x128xbf16, #tpu.memory_space<vmem>>, vector<256x128xbf16>
    %cst = arith.constant dense<0.000000e+00> : vector<128x128xf32>
    %2 = tpu.matmul %0, %1, %cst {dimension_numbers = #tpu.dot_dimension_numbers<[1], [0], [0], [1], [0, 0, 1, 1], [], []>} : vector<128x256xbf16>, vector<256x128xbf16>, vector<128x128xf32> -> vector<128x128xf32>
    %c0_3 = arith.constant 0 : index
    %c0_4 = arith.constant 0 : index
    %3 = vector.load %arg3[%c0_3, %c0_4] : memref<1x128xf32, #tpu.memory_space<vmem>>, vector<1x128xf32>
    %4 = vector.broadcast %3 : vector<1x128xf32> to vector<128x128xf32>
    %5 = arith.addf %2, %4 : vector<128x128xf32>
    %6 = arith.negf %5 : vector<128x128xf32>
    %7 = math.exp %6 : vector<128x128xf32>
    %cst_5 = arith.constant 1.000000e+00 : f32
    %8 = vector.broadcast %cst_5 : f32 to vector<128x128xf32>
    %9 = arith.addf %8, %7 : vector<128x128xf32>
    %10 = arith.divf %8, %9 : vector<128x128xf32>
    %11 = arith.truncf %10 : vector<128x128xf32> to vector<128x128xbf16>
    %c0_6 = arith.constant 0 : index
    %c0_7 = arith.constant 0 : index
    %12 = vector.load %arg4[%c0_6, %c0_7] : memref<128x256xbf16, #tpu.memory_space<vmem>>, vector<128x256xbf16>
    %cst_8 = arith.constant dense<0.000000e+00> : vector<128x256xf32>
    %13 = tpu.matmul %11, %12, %cst_8 {dimension_numbers = #tpu.dot_dimension_numbers<[1], [0], [0], [1], [0, 0, 1, 1], [], []>} : vector<128x128xbf16>, vector<128x256xbf16>, vector<128x256xf32> -> vector<128x256xf32>
    %c0_9 = arith.constant 0 : index
    %c0_10 = arith.constant 0 : index
    %14 = vector.load %arg5[%c0_9, %c0_10] : memref<1x256xf32, #tpu.memory_space<vmem>>, vector<1x256xf32>
    %15 = vector.broadcast %14 : vector<1x256xf32> to vector<128x256xf32>
    %16 = arith.addf %13, %15 : vector<128x256xf32>
    %17 = arith.negf %16 : vector<128x256xf32>
    %18 = math.exp %17 : vector<128x256xf32>
    %cst_11 = arith.constant 1.000000e+00 : f32
    %19 = vector.broadcast %cst_11 : f32 to vector<128x256xf32>
    %20 = arith.addf %19, %18 : vector<128x256xf32>
    %21 = arith.divf %19, %20 : vector<128x256xf32>
    %c0_12 = arith.constant 0 : index
    %c0_13 = arith.constant 0 : index
    %22 = vector.load %arg6[%c0_12, %c0_13] : memref<128x256xf32, #tpu.memory_space<vmem>>, vector<128x256xf32>
    tpu.vector_store %arg6[%c0_12, %c0_13], %21 {strides = array<i32>} : memref<128x256xf32, #tpu.memory_space<vmem>>, vector<128x256xf32>,
    return
  }
  func.func @transform_0(%arg0: i32) -> (i32, i32) {
    %c0_i32 = arith.constant 0 : i32
    %c0_i32_0 = arith.constant 0 : i32
    return %arg0, %c0_i32 : i32, i32
  }
  func.func @transform_1(%arg0: i32) -> (i32, i32) {
    %c0_i32 = arith.constant 0 : i32
    %c0_i32_0 = arith.constant 0 : i32
    %c0_i32_1 = arith.constant 0 : i32
    return %c0_i32, %c0_i32_0 : i32, i32
  }
  func.func @transform_2(%arg0: i32) -> (i32, i32) {
    %c0_i32 = arith.constant 0 : i32
    %c0_i32_0 = arith.constant 0 : i32
    %c0_i32_1 = arith.constant 0 : i32
    return %c0_i32, %c0_i32_0 : i32, i32
  }
  func.func @transform_3(%arg0: i32) -> (i32, i32) {
    %c0_i32 = arith.constant 0 : i32
    %c0_i32_0 = arith.constant 0 : i32
    %c0_i32_1 = arith.constant 0 : i32
    return %c0_i32, %c0_i32_0 : i32, i32
  }
  func.func @transform_4(%arg0: i32) -> (i32, i32) {
    %c0_i32 = arith.constant 0 : i32
    %c0_i32_0 = arith.constant 0 : i32
    %c0_i32_1 = arith.constant 0 : i32
    return %c0_i32, %c0_i32_0 : i32, i32
  }
  func.func @transform_5(%arg0: i32) -> (i32, i32) {
    %c0_i32 = arith.constant 0 : i32
    %c0_i32_0 = arith.constant 0 : i32
    return %arg0, %c0_i32 : i32, i32
  }
}

</mosaic_0001>

<llo_original>
// kernel: autoencoder_forward.1
$region0: #{autoencoder_forward.1}
  #allocation0 [shape = 'u32[]', space=smem, size = 0x4, offset = 0x4, fixed_abs, tag = 'smem constant byte address 0x4 - core index']
  #allocation1 [shape = 'u32[72,128]{1,0:T(1,128)}', space=vmem, size = 0x9000, scoped, tag = 'internal scratch']
  %s0 = inlined_call_operand.vmem [shape: bf16[256,256], index: 0, kind: input, shape index: {}]
  %s1 = inlined_call_operand.vmem [shape: bf16[256,128], index: 1, kind: input, shape index: {}]
  %s2 = inlined_call_operand.vmem [shape: f32[1,128], index: 2, kind: input, shape index: {}]
  %s3 = inlined_call_operand.vmem [shape: bf16[128,256], index: 3, kind: input, shape index: {}]
  %s4 = inlined_call_operand.vmem [shape: f32[1,256], index: 4, kind: input, shape index: {}]
  %s5 = inlined_call_operand.hbm [shape: f32[256,256], index: 5, kind: output, shape index: {}]
  %s6 = sld [smem:[#allocation0]]
  $region53: #{autoencoder_forward.1} parent=0
    _
  %s8 = ssub.s32 1, %s6
  %s9 = scalar_select 0, %s8, %s6
  $region1: #{autoencoder_forward.1} parent=0
    #allocation2 [shape = 'u8[262144]{0}', space=vmem, size = 0x40000, scoped, tag = 'output window, operand 0']
    #allocation3 [shape = 's32[2]{0}', space=sflag, size = 0x8, scoped, tag = 'scoped memory for autoencoder_forward.1']
    %10 = vsyncpa [#allocation3], 0
    %s11 = scalar_lea.sflag [#allocation3], 1
    %12 = vsyncpa %s11, 0
    loop: start=0, step=1, limit=4
    $region2: #{autoencoder_forward.1} parent=1 // loop_pre_header
      _
    $region3: #{autoencoder_forward.1} parent=1 // loop_header
      %s14 = sphi 0, %s18
      %p15 = scmp.ge.s32.totalorder %s14, 4
      %s24 = sphi 0, %s26
      %s27 = sphi 0, %s24
      %s28 = sphi 0, %s27
      %s44 = sphi 0, %s28
      %s48 = sphi 0, %s48
      %s50 = sphi 0, %s48
      %s51 = sphi 0, %s50
      %s65 = sphi 0, %s51
      %s69 = sphi 0, %s69
      %s71 = sphi 0, %s69
      %s72 = sphi 0, %s71
      %s86 = sphi 0, %s72
      %s90 = sphi 0, %s90
      %s92 = sphi 0, %s90
      %s93 = sphi 0, %s92
      %s107 = sphi 0, %s93
      %s111 = sphi 0, %s111
      %s113 = sphi 0, %s111
      %s114 = sphi 0, %s113
      %s128 = sphi 0, %s114
      %s134 = sphi 0, %s136
      %s137 = sphi 0, %s134
      %s138 = sphi 0, %s137
      %s154 = sphi 0, %s138
    $region4: #{autoencoder_forward.1} parent=1 // loop_header_branch
      %17 = sbr.rel (%p15) target = $region8
    $region5: #{autoencoder_forward.1} parent=1 // loop_body
      %s19 = ssub.s32 %s14, 1
      %s20 = ssub.s32 %s14, 2
      %s21 = sadd.s32 %s14, 1
      %s22 = ssub.s32 %s14, %s21
      %p23 = scmp.eq.s32.totalorder %s22, 0
      %s25 = sadd.s32 %s24, 1
      %s26 = scalar_select %p23, %s24, %s25
      %p29 = pneg %p23
      %p30 = scmp.eq.s32.totalorder %s14, 1
      %p31 = por %p29, %p30
      %p32 = scmp.ne.s32.totalorder %s24, %s27
      %p33 = scmp.eq.s32.totalorder %s14, 0
      %p34 = por %p32, %p33
      %p35 = scmp.ne.s32.totalorder %s24, %s27
      %p36 = scmp.eq.s32.totalorder %s19, 1
      %p37 = por %p35, %p36
      %p38 = scmp.ne.s32.totalorder %s27, %s28
      %p39 = scmp.eq.s32.totalorder %s19, 0
      %p40 = por %p38, %p39
      %p41 = scmp.ne.s32.totalorder %s27, %s28
      %p42 = scmp.eq.s32.totalorder %s20, 1
      %p43 = por %p41, %p42
      %p45 = scmp.ne.s32.totalorder %s28, %s44
      %p46 = scmp.eq.s32.totalorder %s20, 0
      %p47 = por %p45, %p46
      %s49 = sadd.s32 %s48, 1
      %p52 = scmp.eq.s32.totalorder %s14, 1
      %p53 = scmp.ne.s32.totalorder %s48, %s50
      %p54 = scmp.eq.s32.totalorder %s14, 0
      %p55 = por %p53, %p54
      %p56 = scmp.ne.s32.totalorder %s48, %s50
      %p57 = scmp.eq.s32.totalorder %s19, 1
      %p58 = por %p56, %p57
      %p59 = scmp.ne.s32.totalorder %s50, %s51
      %p60 = scmp.eq.s32.totalorder %s19, 0
      %p61 = por %p59, %p60
      %p62 = scmp.ne.s32.totalorder %s50, %s51
      %p63 = scmp.eq.s32.totalorder %s20, 1
      %p64 = por %p62, %p63
      %p66 = scmp.ne.s32.totalorder %s51, %s65
      %p67 = scmp.eq.s32.totalorder %s20, 0
      %p68 = por %p66, %p67
      %s70 = sadd.s32 %s69, 1
      %p73 = scmp.eq.s32.totalorder %s14, 1
      %p74 = scmp.ne.s32.totalorder %s69, %s71
      %p75 = scmp.eq.s32.totalorder %s14, 0
      %p76 = por %p74, %p75
      %p77 = scmp.ne.s32.totalorder %s69, %s71
      %p78 = scmp.eq.s32.totalorder %s19, 1
      %p79 = por %p77, %p78
      %p80 = scmp.ne.s32.totalorder %s71, %s72
      %p81 = scmp.eq.s32.totalorder %s19, 0
      %p82 = por %p80, %p81
      %p83 = scmp.ne.s32.totalorder %s71, %s72
      %p84 = scmp.eq.s32.totalorder %s20, 1
      %p85 = por %p83, %p84
      %p87 = scmp.ne.s32.totalorder %s72, %s86
      %p88 = scmp.eq.s32.totalorder %s20, 0
      %p89 = por %p87, %p88
      %s91 = sadd.s32 %s90, 1
      %p94 = scmp.eq.s32.totalorder %s14, 1
      %p95 = scmp.ne.s32.totalorder %s90, %s92
      %p96 = scmp.eq.s32.totalorder %s14, 0
      %p97 = por %p95, %p96
      %p98 = scmp.ne.s32.totalorder %s90, %s92
      %p99 = scmp.eq.s32.totalorder %s19, 1
      %p100 = por %p98, %p99
      %p101 = scmp.ne.s32.totalorder %s92, %s93
      %p102 = scmp.eq.s32.totalorder %s19, 0
      %p103 = por %p101, %p102
      %p104 = scmp.ne.s32.totalorder %s92, %s93
      %p105 = scmp.eq.s32.totalorder %s20, 1
      %p106 = por %p104, %p105
      %p108 = scmp.ne.s32.totalorder %s93, %s107
      %p109 = scmp.eq.s32.totalorder %s20, 0
      %p110 = por %p108, %p109
      %s112 = sadd.s32 %s111, 1
      %p115 = scmp.eq.s32.totalorder %s14, 1
      %p116 = scmp.ne.s32.totalorder %s111, %s113
      %p117 = scmp.eq.s32.totalorder %s14, 0
      %p118 = por %p116, %p117
      %p119 = scmp.ne.s32.totalorder %s111, %s113
      %p120 = scmp.eq.s32.totalorder %s19, 1
      %p121 = por %p119, %p120
      %p122 = scmp.ne.s32.totalorder %s113, %s114
      %p123 = scmp.eq.s32.totalorder %s19, 0
      %p124 = por %p122, %p123
      %p125 = scmp.ne.s32.totalorder %s113, %s114
      %p126 = scmp.eq.s32.totalorder %s20, 1
      %p127 = por %p125, %p126
      %p129 = scmp.ne.s32.totalorder %s114, %s128
      %p130 = scmp.eq.s32.totalorder %s20, 0
      %p131 = por %p129, %p130
      %s132 = ssub.s32 %s14, %s21
      %p133 = scmp.eq.s32.totalorder %s132, 0
      %s135 = sadd.s32 %s134, 1
      %s136 = scalar_select %p133, %s134, %s135
      %p139 = pneg %p133
      %p140 = scmp.eq.s32.totalorder %s14, 1
      %p141 = por %p139, %p140
      %p142 = scmp.ne.s32.totalorder %s134, %s137
      %p143 = scmp.eq.s32.totalorder %s14, 0
      %p144 = por %p142, %p143
      %p145 = scmp.ne.s32.totalorder %s134, %s137
      %p146 = scmp.eq.s32.totalorder %s19, 1
      %p147 = por %p145, %p146
      %p148 = scmp.ne.s32.totalorder %s137, %s138
      %p149 = scmp.eq.s32.totalorder %s19, 0
      %p150 = por %p148, %p149
      %p151 = scmp.ne.s32.totalorder %s137, %s138
      %p152 = scmp.eq.s32.totalorder %s20, 1
      %p153 = por %p151, %p152
      %p155 = scmp.ne.s32.totalorder %s138, %s154
      %p156 = scmp.eq.s32.totalorder %s20, 0
      %p157 = por %p155, %p156
      %p158 = scmp.le.s32.totalorder 1, %s14
      %p159 = scmp.lt.s32.totalorder %s14, 3
      %p160 = pnand %p158, %p159
      %p161 = pneg %p160
      // Predicated region
      $region9: #{autoencoder_forward.1} parent=5 // pred_check
        _
      $region10: #{autoencoder_forward.1} parent=5 // pred_check_branch
        %163 = sbr.rel (%p160) target = $region12
      $region11: #{autoencoder_forward.1} parent=5 // pred_region
        %s164 = ssub.s32 %s14, 1
        // Predicated region
        $region13: #{autoencoder_forward.1} parent=11 // pred_check
          %p165 = pneg %p61
        $region14: #{autoencoder_forward.1} parent=11 // pred_check_branch
          %167 = sbr.rel (%p165) target = $region16
        $region15: #{autoencoder_forward.1} parent=11 // pred_region
          _
        $region16: #{autoencoder_forward.1} parent=11 // pred_fallthru
          _
        // Predicated region
        $region17: #{autoencoder_forward.1} parent=11 // pred_check
          %p168 = pneg %p82
        $region18: #{autoencoder_forward.1} parent=11 // pred_check_branch
          %170 = sbr.rel (%p168) target = $region20
        $region19: #{autoencoder_forward.1} parent=11 // pred_region
          _
        $region20: #{autoencoder_forward.1} parent=11 // pred_fallthru
          _
        // Predicated region
        $region21: #{autoencoder_forward.1} parent=11 // pred_check
          %p171 = pneg %p103
        $region22: #{autoencoder_forward.1} parent=11 // pred_check_branch
          %173 = sbr.rel (%p171) target = $region24
        $region23: #{autoencoder_forward.1} parent=11 // pred_region
          _
        $region24: #{autoencoder_forward.1} parent=11 // pred_fallthru
          _
        // Predicated region
        $region25: #{autoencoder_forward.1} parent=11 // pred_check
          %p174 = pneg %p124
        $region26: #{autoencoder_forward.1} parent=11 // pred_check_branch
          %176 = sbr.rel (%p174) target = $region28
        $region27: #{autoencoder_forward.1} parent=11 // pred_region
          _
        $region28: #{autoencoder_forward.1} parent=11 // pred_fallthru
          _
      $region12: #{autoencoder_forward.1} parent=5 // pred_fallthru
        _
      %p177 = scmp.lt.s32.totalorder %s14, 2
      // Predicated region
      $region29: #{autoencoder_forward.1} parent=5 // pred_check
        %p178 = pneg %p177
      $region30: #{autoencoder_forward.1} parent=5 // pred_check_branch
        %180 = sbr.rel (%p178) target = $region32
      $region31: #{autoencoder_forward.1} parent=5 // pred_region
        // Predicated region
        $region33: #{autoencoder_forward.1} parent=31 // pred_check
          %p181 = pneg %p34
        $region34: #{autoencoder_forward.1} parent=31 // pred_check_branch
          %183 = sbr.rel (%p181) target = $region36
        $region35: #{autoencoder_forward.1} parent=31 // pred_region
          %s184 = smul.u32 16, %s14
          %p185 = scmp.lt.s32.totalorder %s184, 31
          %s186 = scalar_select %p185, %s184, 31
          %s187 = smul.addr %s186, 2
          %s188 = smul.addr %s187, 4
          %s189 = scalar_lea.vmem %s0, %s188
          %s190 = smul.u32 16, %s14
        $region36: #{autoencoder_forward.1} parent=31 // pred_fallthru
          _
      $region32: #{autoencoder_forward.1} parent=5 // pred_fallthru
        _
      %p191 = scmp.le.s32.totalorder 1, %s14
      %p192 = scmp.lt.s32.totalorder %s14, 3
      %p193 = pnand %p191, %p192
      %p194 = pneg %p193
      // Predicated region
      $region37: #{autoencoder_forward.1} parent=5 // pred_check
        _
      $region38: #{autoencoder_forward.1} parent=5 // pred_check_branch
        %196 = sbr.rel (%p193) target = $region40
      $region39: #{autoencoder_forward.1} parent=5 // pred_region
        %s197 = ssub.s32 %s14, 1
        %s198 = smul.u32 16, %s19
        %p199 = scmp.lt.s32.totalorder %s198, 31
        %s200 = scalar_select %p199, %s198, 31
        %s201 = smul.addr %s200, 2
        %s202 = smul.addr %s201, 4
        %s203 = scalar_lea.vmem %s0, %s202
        %p204 = pneg %p40
        %p205 = pneg %p37
        %p206 = pneg %p61
        %p207 = pneg %p58
        %p208 = pneg %p82
        %p209 = pneg %p79
        %p210 = pneg %p103
        %p211 = pneg %p100
        %p212 = pneg %p124
        %p213 = pneg %p121
        %p214 = pneg %p150
        %p215 = pneg %p147
        %s216 = sand.u32 %s137, 1
        %s217 = scalar_lea.sflag [#allocation3], %s216
        %s218 = sand.u32 %s137, 1
        %s219 = smul.addr %s218, 256
        %s220 = scalar_lea.vmem [#allocation2], %s219
        %s221 = smul.u32 16, %s19
        %p222 = scmp.lt.s32.totalorder %s221, 31
        %s223 = scalar_select %p222, %s221, 31
        %s224 = smul.addr %s223, 2
        %s225 = smul.addr %s224, 4
        %s226 = scalar_lea.vmem %s0, %s225
        %s227 = smul.u32 16, %s19
        %s228 = smul.u32 16, %s19
        %v229 = vld [vmem:[%s226] sm:$0xff]
        %v230 = vld [vmem:[%s226 + $0x8] sm:$0xff]
        %v231 = vld [vmem:[%s226 + $0x10] sm:$0xff]
        %v232 = vld [vmem:[%s226 + $0x18] sm:$0xff]
        %v233 = vld [vmem:[%s226 + $0x20] sm:$0xff]
        %v234 = vld [vmem:[%s226 + $0x28] sm:$0xff]
        %v235 = vld [vmem:[%s226 + $0x30] sm:$0xff]
        %v236 = vld [vmem:[%s226 + $0x38] sm:$0xff]
        %v237 = vld [vmem:[%s226 + $0x40] sm:$0xff]
        %v238 = vld [vmem:[%s226 + $0x48] sm:$0xff]
        %v239 = vld [vmem:[%s226 + $0x50] sm:$0xff]
        %v240 = vld [vmem:[%s226 + $0x58] sm:$0xff]
        %v241 = vld [vmem:[%s226 + $0x60] sm:$0xff]
        %v242 = vld [vmem:[%s226 + $0x68] sm:$0xff]
        %v243 = vld [vmem:[%s226 + $0x70] sm:$0xff]
        %v244 = vld [vmem:[%s226 + $0x78] sm:$0xff]
        %v245 = vld [vmem:[%s1] sm:$0xf]
        %v246 = vld [vmem:[%s1 + $0x4] sm:$0xf]
        %v247 = vld [vmem:[%s1 + $0x8] sm:$0xf]
        %v248 = vld [vmem:[%s1 + $0xc] sm:$0xf]
        %v249 = vld [vmem:[%s1 + $0x10] sm:$0xf]
        %v250 = vld [vmem:[%s1 + $0x14] sm:$0xf]
        %v251 = vld [vmem:[%s1 + $0x18] sm:$0xf]
        %v252 = vld [vmem:[%s1 + $0x1c] sm:$0xf]
        %v253 = vld [vmem:[%s1 + $0x20] sm:$0xf]
        %v254 = vld [vmem:[%s1 + $0x24] sm:$0xf]
        %v255 = vld [vmem:[%s1 + $0x28] sm:$0xf]
        %v256 = vld [vmem:[%s1 + $0x2c] sm:$0xf]
        %v257 = vld [vmem:[%s1 + $0x30] sm:$0xf]
        %v258 = vld [vmem:[%s1 + $0x34] sm:$0xf]
        %v259 = vld [vmem:[%s1 + $0x38] sm:$0xf]
        %v260 = vld [vmem:[%s1 + $0x3c] sm:$0xf]
        %v261 = vld [vmem:[%s1 + $0x40] sm:$0xf]
        %v262 = vld [vmem:[%s1 + $0x44] sm:$0xf]
        %v263 = vld [vmem:[%s1 + $0x48] sm:$0xf]
        %v264 = vld [vmem:[%s1 + $0x4c] sm:$0xf]
        %v265 = vld [vmem:[%s1 + $0x50] sm:$0xf]
        %v266 = vld [vmem:[%s1 + $0x54] sm:$0xf]
        %v267 = vld [vmem:[%s1 + $0x58] sm:$0xf]
        %v268 = vld [vmem:[%s1 + $0x5c] sm:$0xf]
        %v269 = vld [vmem:[%s1 + $0x60] sm:$0xf]
        %v270 = vld [vmem:[%s1 + $0x64] sm:$0xf]
        %v271 = vld [vmem:[%s1 + $0x68] sm:$0xf]
        %v272 = vld [vmem:[%s1 + $0x6c] sm:$0xf]
        %v273 = vld [vmem:[%s1 + $0x70] sm:$0xf]
        %v274 = vld [vmem:[%s1 + $0x74] sm:$0xf]
        %v275 = vld [vmem:[%s1 + $0x78] sm:$0xf]
        %v276 = vld [vmem:[%s1 + $0x7c] sm:$0xf]
        %v277 = vld [vmem:[%s2] sm:$0x1]
        %v279 = vperm.slane %v277, 0
        %v297 = vunpack.c.l.b16 %v229
        %v298 = vunpack.c.h.b16 %v229
        %v299 = vunpack.c.l.b16 %v230
        %v300 = vunpack.c.h.b16 %v230
        %v301 = vunpack.c.l.b16 %v231
        %v302 = vunpack.c.h.b16 %v231
        %v303 = vunpack.c.l.b16 %v232
        %v304 = vunpack.c.h.b16 %v232
        %v305 = vunpack.c.l.b16 %v233
        %v306 = vunpack.c.h.b16 %v233
        %v307 = vunpack.c.l.b16 %v234
        %v308 = vunpack.c.h.b16 %v234
        %v309 = vunpack.c.l.b16 %v235
        %v310 = vunpack.c.h.b16 %v235
        %v311 = vunpack.c.l.b16 %v236
        %v312 = vunpack.c.h.b16 %v236
        %v313 = vunpack.c.l.b16 %v237
        %v314 = vunpack.c.h.b16 %v237
        %v315 = vunpack.c.l.b16 %v238
        %v316 = vunpack.c.h.b16 %v238
        %v317 = vunpack.c.l.b16 %v239
        %v318 = vunpack.c.h.b16 %v239
        %v319 = vunpack.c.l.b16 %v240
        %v320 = vunpack.c.h.b16 %v240
        %v321 = vunpack.c.l.b16 %v241
        %v322 = vunpack.c.h.b16 %v241
        %v323 = vunpack.c.l.b16 %v242
        %v324 = vunpack.c.h.b16 %v242
        %v325 = vunpack.c.l.b16 %v243
        %v326 = vunpack.c.h.b16 %v243
        %v327 = vunpack.c.l.b16 %v244
        %v328 = vunpack.c.h.b16 %v244
        %v329 = vpack.c.b16 %v299, %v297
        %v330 = vpack.c.b16 %v300, %v298
        %v331 = vpack.c.b16 %v303, %v301
        %v332 = vpack.c.b16 %v304, %v302
        %v333 = vpack.c.b16 %v307, %v305
        %v334 = vpack.c.b16 %v308, %v306
        %v335 = vpack.c.b16 %v311, %v309
        %v336 = vpack.c.b16 %v312, %v310
        %v337 = vpack.c.b16 %v315, %v313
        %v338 = vpack.c.b16 %v316, %v314
        %v339 = vpack.c.b16 %v319, %v317
        %v340 = vpack.c.b16 %v320, %v318
        %v341 = vpack.c.b16 %v323, %v321
        %v342 = vpack.c.b16 %v324, %v322
        %v343 = vpack.c.b16 %v327, %v325
        %v344 = vpack.c.b16 %v328, %v326
        %v393 = vunpack.c.l.b16 %v245
        %v394 = vunpack.c.l.b16 %v246
        %v395 = vunpack.c.l.b16 %v247
        %v396 = vunpack.c.l.b16 %v248
        %v397 = vunpack.c.l.b16 %v249
        %v398 = vunpack.c.l.b16 %v250
        %v399 = vunpack.c.l.b16 %v251
        %v400 = vunpack.c.l.b16 %v252
        %v401 = vunpack.c.l.b16 %v253
        %v402 = vunpack.c.l.b16 %v254
        %v403 = vunpack.c.l.b16 %v255
        %v404 = vunpack.c.l.b16 %v256
        %v405 = vunpack.c.l.b16 %v257
        %v406 = vunpack.c.l.b16 %v258
        %v407 = vunpack.c.l.b16 %v259
        %v408 = vunpack.c.l.b16 %v260
        %v409 = vunpack.c.l.b16 %v261
        %v410 = vunpack.c.l.b16 %v262
        %v411 = vunpack.c.l.b16 %v263
        %v412 = vunpack.c.l.b16 %v264
        %v413 = vunpack.c.l.b16 %v265
        %v414 = vunpack.c.l.b16 %v266
        %v415 = vunpack.c.l.b16 %v267
        %v416 = vunpack.c.l.b16 %v268
        %v417 = vunpack.c.l.b16 %v269
        %v418 = vunpack.c.l.b16 %v270
        %v419 = vunpack.c.l.b16 %v271
        %v420 = vunpack.c.l.b16 %v272
        %v421 = vunpack.c.l.b16 %v273
        %v422 = vunpack.c.l.b16 %v274
        %v423 = vunpack.c.l.b16 %v275
        %v424 = vunpack.c.l.b16 %v276
        %v425 = vpack.c.b16 %v394, %v393
        %v426 = vpack.c.b16 %v396, %v395
        %v427 = vpack.c.b16 %v398, %v397
        %v428 = vpack.c.b16 %v400, %v399
        %v429 = vpack.c.b16 %v402, %v401
        %v430 = vpack.c.b16 %v404, %v403
        %v431 = vpack.c.b16 %v406, %v405
        %v432 = vpack.c.b16 %v408, %v407
        %v433 = vpack.c.b16 %v410, %v409
        %v434 = vpack.c.b16 %v412, %v411
        %v435 = vpack.c.b16 %v414, %v413
        %v436 = vpack.c.b16 %v416, %v415
        %v437 = vpack.c.b16 %v418, %v417
        %v438 = vpack.c.b16 %v420, %v419
        %v439 = vpack.c.b16 %v422, %v421
        %v440 = vpack.c.b16 %v424, %v423
        %457 = vmatpush.bf16.msra.mxu0 %v432
        %458 = vmatpush.bf16.msra.mxu0 %v431
        %459 = vmatpush.bf16.msra.mxu0 %v430
        %460 = vmatpush.bf16.msra.mxu0 %v429
        %461 = vmatpush.bf16.msra.mxu0 %v428
        %462 = vmatpush.bf16.msra.mxu0 %v427
        %463 = vmatpush.bf16.msra.mxu0 %v426
        %464 = vmatpush.bf16.msra.mxu0 %v425
        %465 = vmatmul.bf16.gmra.mxu0 %v329
        %v466 = vpop.f32.mrf.mxu0
        %v467 = vadd.f32 %v279, %v466
        %v468 = vpop.f32.mrf.mxu0
        %v469 = vadd.f32 %v279, %v468
        %470 = vmatmul.bf16.gmra.mxu0 %v331
        %v471 = vpop.f32.mrf.mxu0
        %v472 = vadd.f32 %v279, %v471
        %v473 = vpop.f32.mrf.mxu0
        %v474 = vadd.f32 %v279, %v473
        %475 = vmatmul.bf16.gmra.mxu0 %v333
        %v476 = vpop.f32.mrf.mxu0
        %v477 = vadd.f32 %v279, %v476
        %v478 = vpop.f32.mrf.mxu0
        %v479 = vadd.f32 %v279, %v478
        %480 = vmatmul.bf16.gmra.mxu0 %v335
        %v481 = vpop.f32.mrf.mxu0
        %v482 = vadd.f32 %v279, %v481
        %v483 = vpop.f32.mrf.mxu0
        %v484 = vadd.f32 %v279, %v483
        %485 = vmatmul.bf16.gmra.mxu0 %v337
        %v486 = vpop.f32.mrf.mxu0
        %v487 = vadd.f32 %v279, %v486
        %v488 = vpop.f32.mrf.mxu0
        %v489 = vadd.f32 %v279, %v488
        %490 = vmatmul.bf16.gmra.mxu0 %v339
        %v491 = vpop.f32.mrf.mxu0
        %v492 = vadd.f32 %v279, %v491
        %v493 = vpop.f32.mrf.mxu0
        %v494 = vadd.f32 %v279, %v493
        %495 = vmatmul.bf16.gmra.mxu0 %v341
        %v496 = vpop.f32.mrf.mxu0
        %v497 = vadd.f32 %v279, %v496
        %v498 = vpop.f32.mrf.mxu0
        %v499 = vadd.f32 %v279, %v498
        %500 = vmatmul.bf16.gmra.mxu0 %v343
        %v501 = vpop.f32.mrf.mxu0
        %v502 = vadd.f32 %v279, %v501
        %v503 = vpop.f32.mrf.mxu0
        %v504 = vadd.f32 %v279, %v503
        %505 = vdwg.mxu0
        %506 = vmatpush.bf16.msra.mxu0 %v440
        %507 = vmatpush.bf16.msra.mxu0 %v439
        %508 = vmatpush.bf16.msra.mxu0 %v438
        %509 = vmatpush.bf16.msra.mxu0 %v437
        %510 = vmatpush.bf16.msra.mxu0 %v436
        %511 = vmatpush.bf16.msra.mxu0 %v435
        %512 = vmatpush.bf16.msra.mxu0 %v434
        %513 = vmatpush.bf16.msra.mxu0 %v433
        %514 = vmatmul.bf16.gmra.mxu0 %v330
        %v515 = vpop.f32.mrf.mxu0
        %v516 = vadd.f32 %v467, %v515
        %v517 = vpop.f32.mrf.mxu0
        %v518 = vadd.f32 %v469, %v517
        %519 = vmatmul.bf16.gmra.mxu0 %v332
        %v520 = vpop.f32.mrf.mxu0
        %v521 = vadd.f32 %v472, %v520
        %v522 = vpop.f32.mrf.mxu0
        %v523 = vadd.f32 %v474, %v522
        %524 = vmatmul.bf16.gmra.mxu0 %v334
        %v525 = vpop.f32.mrf.mxu0
        %v526 = vadd.f32 %v477, %v525
        %v527 = vpop.f32.mrf.mxu0
        %v528 = vadd.f32 %v479, %v527
        %529 = vmatmul.bf16.gmra.mxu0 %v336
        %v530 = vpop.f32.mrf.mxu0
        %v531 = vadd.f32 %v482, %v530
        %v532 = vpop.f32.mrf.mxu0
        %v533 = vadd.f32 %v484, %v532
        %534 = vmatmul.bf16.gmra.mxu0 %v338
        %v535 = vpop.f32.mrf.mxu0
        %v536 = vadd.f32 %v487, %v535
        %v537 = vpop.f32.mrf.mxu0
        %v538 = vadd.f32 %v489, %v537
        %539 = vmatmul.bf16.gmra.mxu0 %v340
        %v540 = vpop.f32.mrf.mxu0
        %v541 = vadd.f32 %v492, %v540
        %v542 = vpop.f32.mrf.mxu0
        %v543 = vadd.f32 %v494, %v542
        %544 = vmatmul.bf16.gmra.mxu0 %v342
        %v545 = vpop.f32.mrf.mxu0
        %v546 = vadd.f32 %v497, %v545
        %v547 = vpop.f32.mrf.mxu0
        %v548 = vadd.f32 %v499, %v547
        %549 = vmatmul.bf16.gmra.mxu0 %v344
        %v550 = vpop.f32.mrf.mxu0
        %v551 = vadd.f32 %v502, %v550
        %v552 = vpop.f32.mrf.mxu0
        %v553 = vadd.f32 %v504, %v552
        %554 = vdwg.mxu0
        %v555 = vxor.u32 %v516, 2147483648
        %v556 = vxor.u32 %v518, 2147483648
        %v557 = vxor.u32 %v521, 2147483648
        %v558 = vxor.u32 %v523, 2147483648
        %v559 = vxor.u32 %v526, 2147483648
        %v560 = vxor.u32 %v528, 2147483648
        %v561 = vxor.u32 %v531, 2147483648
        %v562 = vxor.u32 %v533, 2147483648
        %v563 = vxor.u32 %v536, 2147483648
        %v564 = vxor.u32 %v538, 2147483648
        %v565 = vxor.u32 %v541, 2147483648
        %v566 = vxor.u32 %v543, 2147483648
        %v567 = vxor.u32 %v546, 2147483648
        %v568 = vxor.u32 %v548, 2147483648
        %v569 = vxor.u32 %v551, 2147483648
        %v570 = vxor.u32 %v553, 2147483648
        %v571 = vmul.f32 %v555, 1.442695
        %v572 = vpow.pop %v571
        %v573 = vmul.f32 %v556, 1.442695
        %v574 = vpow.pop %v573
        %v575 = vmul.f32 %v557, 1.442695
        %v576 = vpow.pop %v575
        %v577 = vmul.f32 %v558, 1.442695
        %v578 = vpow.pop %v577
        %v579 = vmul.f32 %v559, 1.442695
        %v580 = vpow.pop %v579
        %v581 = vmul.f32 %v560, 1.442695
        %v582 = vpow.pop %v581
        %v583 = vmul.f32 %v561, 1.442695
        %v584 = vpow.pop %v583
        %v585 = vmul.f32 %v562, 1.442695
        %v586 = vpow.pop %v585
        %v587 = vmul.f32 %v563, 1.442695
        %v588 = vpow.pop %v587
        %v589 = vmul.f32 %v564, 1.442695
        %v590 = vpow.pop %v589
        %v591 = vmul.f32 %v565, 1.442695
        %v592 = vpow.pop %v591
        %v593 = vmul.f32 %v566, 1.442695
        %v594 = vpow.pop %v593
        %v595 = vmul.f32 %v567, 1.442695
        %v596 = vpow.pop %v595
        %v597 = vmul.f32 %v568, 1.442695
        %v598 = vpow.pop %v597
        %v599 = vmul.f32 %v569, 1.442695
        %v600 = vpow.pop %v599
        %v601 = vmul.f32 %v570, 1.442695
        %v602 = vpow.pop %v601
        %v603 = vadd.f32 %v572, 1.0
        %v604 = vadd.f32 %v574, 1.0
        %v605 = vadd.f32 %v576, 1.0
        %v606 = vadd.f32 %v578, 1.0
        %v607 = vadd.f32 %v580, 1.0
        %v608 = vadd.f32 %v582, 1.0
        %v609 = vadd.f32 %v584, 1.0
        %v610 = vadd.f32 %v586, 1.0
        %v611 = vadd.f32 %v588, 1.0
        %v612 = vadd.f32 %v590, 1.0
        %v613 = vadd.f32 %v592, 1.0
        %v614 = vadd.f32 %v594, 1.0
        %v615 = vadd.f32 %v596, 1.0
        %v616 = vadd.f32 %v598, 1.0
        %v617 = vadd.f32 %v600, 1.0
        %v618 = vadd.f32 %v602, 1.0
        %v619 = vrcp.pop %v603
        %v620 = vmul.f32 %v603, %v619
        %v621 = vsub.f32 1.0, %v620
        %v622 = vmul.f32 %v619, %v621
        %v623 = vadd.f32 %v619, %v622
        %vm624 = vweird.f32 %v603
        %vm625 = vweird.f32 %v619
        %vm626 = vmor %vm624, %vm625
        %v627 = vsel %vm626, %v619, %v623
        %v628 = vand.u32 2147483647, %v603
        %vm629 = vcmp.eq.f32.partialorder %v628, 8.507059e+37
        %v630 = vand.u32 %v603, 2147483648
        %v631 = vor.u32 1.1754944e-38, %v630
        %v632 = vsel %vm629, %v631, %v627
        %v633 = vmul.f32 1.0, %v632
        %v634 = vrcp.pop %v604
        %v635 = vmul.f32 %v604, %v634
        %v636 = vsub.f32 1.0, %v635
        %v637 = vmul.f32 %v634, %v636
        %v638 = vadd.f32 %v634, %v637
        %vm639 = vweird.f32 %v604
        %vm640 = vweird.f32 %v634
        %vm641 = vmor %vm639, %vm640
        %v642 = vsel %vm641, %v634, %v638
        %v643 = vand.u32 2147483647, %v604
        %vm644 = vcmp.eq.f32.partialorder %v643, 8.507059e+37
        %v645 = vand.u32 %v604, 2147483648
        %v646 = vor.u32 1.1754944e-38, %v645
        %v647 = vsel %vm644, %v646, %v642
        %v648 = vmul.f32 1.0, %v647
        %v649 = vrcp.pop %v605
        %v650 = vmul.f32 %v605, %v649
        %v651 = vsub.f32 1.0, %v650
        %v652 = vmul.f32 %v649, %v651
        %v653 = vadd.f32 %v649, %v652
        %vm654 = vweird.f32 %v605
        %vm655 = vweird.f32 %v649
        %vm656 = vmor %vm654, %vm655
        %v657 = vsel %vm656, %v649, %v653
        %v658 = vand.u32 2147483647, %v605
        %vm659 = vcmp.eq.f32.partialorder %v658, 8.507059e+37
        %v660 = vand.u32 %v605, 2147483648
        %v661 = vor.u32 1.1754944e-38, %v660
        %v662 = vsel %vm659, %v661, %v657
        %v663 = vmul.f32 1.0, %v662
        %v664 = vrcp.pop %v606
        %v665 = vmul.f32 %v606, %v664
        %v666 = vsub.f32 1.0, %v665
        %v667 = vmul.f32 %v664, %v666
        %v668 = vadd.f32 %v664, %v667
        %vm669 = vweird.f32 %v606
        %vm670 = vweird.f32 %v664
        %vm671 = vmor %vm669, %vm670
        %v672 = vsel %vm671, %v664, %v668
        %v673 = vand.u32 2147483647, %v606
        %vm674 = vcmp.eq.f32.partialorder %v673, 8.507059e+37
        %v675 = vand.u32 %v606, 2147483648
        %v676 = vor.u32 1.1754944e-38, %v675
        %v677 = vsel %vm674, %v676, %v672
        %v678 = vmul.f32 1.0, %v677
        %v679 = vrcp.pop %v607
        %v680 = vmul.f32 %v607, %v679
        %v681 = vsub.f32 1.0, %v680
        %v682 = vmul.f32 %v679, %v681
        %v683 = vadd.f32 %v679, %v682
        %vm684 = vweird.f32 %v607
        %vm685 = vweird.f32 %v679
        %vm686 = vmor %vm684, %vm685
        %v687 = vsel %vm686, %v679, %v683
        %v688 = vand.u32 2147483647, %v607
        %vm689 = vcmp.eq.f32.partialorder %v688, 8.507059e+37
        %v690 = vand.u32 %v607, 2147483648
        %v691 = vor.u32 1.1754944e-38, %v690
        %v692 = vsel %vm689, %v691, %v687
        %v693 = vmul.f32 1.0, %v692
        %v694 = vrcp.pop %v608
        %v695 = vmul.f32 %v608, %v694
        %v696 = vsub.f32 1.0, %v695
        %v697 = vmul.f32 %v694, %v696
        %v698 = vadd.f32 %v694, %v697
        %vm699 = vweird.f32 %v608
        %vm700 = vweird.f32 %v694
        %vm701 = vmor %vm699, %vm700
        %v702 = vsel %vm701, %v694, %v698
        %v703 = vand.u32 2147483647, %v608
        %vm704 = vcmp.eq.f32.partialorder %v703, 8.507059e+37
        %v705 = vand.u32 %v608, 2147483648
        %v706 = vor.u32 1.1754944e-38, %v705
        %v707 = vsel %vm704, %v706, %v702
        %v708 = vmul.f32 1.0, %v707
        %v709 = vrcp.pop %v609
        %v710 = vmul.f32 %v609, %v709
        %v711 = vsub.f32 1.0, %v710
        %v712 = vmul.f32 %v709, %v711
        %v713 = vadd.f32 %v709, %v712
        %vm714 = vweird.f32 %v609
        %vm715 = vweird.f32 %v709
        %vm716 = vmor %vm714, %vm715
        %v717 = vsel %vm716, %v709, %v713
        %v718 = vand.u32 2147483647, %v609
        %vm719 = vcmp.eq.f32.partialorder %v718, 8.507059e+37
        %v720 = vand.u32 %v609, 2147483648
        %v721 = vor.u32 1.1754944e-38, %v720
        %v722 = vsel %vm719, %v721, %v717
        %v723 = vmul.f32 1.0, %v722
        %v724 = vrcp.pop %v610
        %v725 = vmul.f32 %v610, %v724
        %v726 = vsub.f32 1.0, %v725
        %v727 = vmul.f32 %v724, %v726
        %v728 = vadd.f32 %v724, %v727
        %vm729 = vweird.f32 %v610
        %vm730 = vweird.f32 %v724
        %vm731 = vmor %vm729, %vm730
        %v732 = vsel %vm731, %v724, %v728
        %v733 = vand.u32 2147483647, %v610
        %vm734 = vcmp.eq.f32.partialorder %v733, 8.507059e+37
        %v735 = vand.u32 %v610, 2147483648
        %v736 = vor.u32 1.1754944e-38, %v735
        %v737 = vsel %vm734, %v736, %v732
        %v738 = vmul.f32 1.0, %v737
        %v739 = vrcp.pop %v611
        %v740 = vmul.f32 %v611, %v739
        %v741 = vsub.f32 1.0, %v740
        %v742 = vmul.f32 %v739, %v741
        %v743 = vadd.f32 %v739, %v742
        %vm744 = vweird.f32 %v611
        %vm745 = vweird.f32 %v739
        %vm746 = vmor %vm744, %vm745
        %v747 = vsel %vm746, %v739, %v743
        %v748 = vand.u32 2147483647, %v611
        %vm749 = vcmp.eq.f32.partialorder %v748, 8.507059e+37
        %v750 = vand.u32 %v611, 2147483648
        %v751 = vor.u32 1.1754944e-38, %v750
        %v752 = vsel %vm749, %v751, %v747
        %v753 = vmul.f32 1.0, %v752
        %v754 = vrcp.pop %v612
        %v755 = vmul.f32 %v612, %v754
        %v756 = vsub.f32 1.0, %v755
        %v757 = vmul.f32 %v754, %v756
        %v758 = vadd.f32 %v754, %v757
        %vm759 = vweird.f32 %v612
        %vm760 = vweird.f32 %v754
        %vm761 = vmor %vm759, %vm760
        %v762 = vsel %vm761, %v754, %v758
        %v763 = vand.u32 2147483647, %v612
        %vm764 = vcmp.eq.f32.partialorder %v763, 8.507059e+37
        %v765 = vand.u32 %v612, 2147483648
        %v766 = vor.u32 1.1754944e-38, %v765
        %v767 = vsel %vm764, %v766, %v762
        %v768 = vmul.f32 1.0, %v767
        %v769 = vrcp.pop %v613
        %v770 = vmul.f32 %v613, %v769
        %v771 = vsub.f32 1.0, %v770
        %v772 = vmul.f32 %v769, %v771
        %v773 = vadd.f32 %v769, %v772
        %vm774 = vweird.f32 %v613
        %vm775 = vweird.f32 %v769
        %vm776 = vmor %vm774, %vm775
        %v777 = vsel %vm776, %v769, %v773
        %v778 = vand.u32 2147483647, %v613
        %vm779 = vcmp.eq.f32.partialorder %v778, 8.507059e+37
        %v780 = vand.u32 %v613, 2147483648
        %v781 = vor.u32 1.1754944e-38, %v780
        %v782 = vsel %vm779, %v781, %v777
        %v783 = vmul.f32 1.0, %v782
        %v784 = vrcp.pop %v614
        %v785 = vmul.f32 %v614, %v784
        %v786 = vsub.f32 1.0, %v785
        %v787 = vmul.f32 %v784, %v786
        %v788 = vadd.f32 %v784, %v787
        %vm789 = vweird.f32 %v614
        %vm790 = vweird.f32 %v784
        %vm791 = vmor %vm789, %vm790
        %v792 = vsel %vm791, %v784, %v788
        %v793 = vand.u32 2147483647, %v614
        %vm794 = vcmp.eq.f32.partialorder %v793, 8.507059e+37
        %v795 = vand.u32 %v614, 2147483648
        %v796 = vor.u32 1.1754944e-38, %v795
        %v797 = vsel %vm794, %v796, %v792
        %v798 = vmul.f32 1.0, %v797
        %v799 = vrcp.pop %v615
        %v800 = vmul.f32 %v615, %v799
        %v801 = vsub.f32 1.0, %v800
        %v802 = vmul.f32 %v799, %v801
        %v803 = vadd.f32 %v799, %v802
        %vm804 = vweird.f32 %v615
        %vm805 = vweird.f32 %v799
        %vm806 = vmor %vm804, %vm805
        %v807 = vsel %vm806, %v799, %v803
        %v808 = vand.u32 2147483647, %v615
        %vm809 = vcmp.eq.f32.partialorder %v808, 8.507059e+37
        %v810 = vand.u32 %v615, 2147483648
        %v811 = vor.u32 1.1754944e-38, %v810
        %v812 = vsel %vm809, %v811, %v807
        %v813 = vmul.f32 1.0, %v812
        %v814 = vrcp.pop %v616
        %v815 = vmul.f32 %v616, %v814
        %v816 = vsub.f32 1.0, %v815
        %v817 = vmul.f32 %v814, %v816
        %v818 = vadd.f32 %v814, %v817
        %vm819 = vweird.f32 %v616
        %vm820 = vweird.f32 %v814
        %vm821 = vmor %vm819, %vm820
        %v822 = vsel %vm821, %v814, %v818
        %v823 = vand.u32 2147483647, %v616
        %vm824 = vcmp.eq.f32.partialorder %v823, 8.507059e+37
        %v825 = vand.u32 %v616, 2147483648
        %v826 = vor.u32 1.1754944e-38, %v825
        %v827 = vsel %vm824, %v826, %v822
        %v828 = vmul.f32 1.0, %v827
        %v829 = vrcp.pop %v617
        %v830 = vmul.f32 %v617, %v829
        %v831 = vsub.f32 1.0, %v830
        %v832 = vmul.f32 %v829, %v831
        %v833 = vadd.f32 %v829, %v832
        %vm834 = vweird.f32 %v617
        %vm835 = vweird.f32 %v829
        %vm836 = vmor %vm834, %vm835
        %v837 = vsel %vm836, %v829, %v833
        %v838 = vand.u32 2147483647, %v617
        %vm839 = vcmp.eq.f32.partialorder %v838, 8.507059e+37
        %v840 = vand.u32 %v617, 2147483648
        %v841 = vor.u32 1.1754944e-38, %v840
        %v842 = vsel %vm839, %v841, %v837
        %v843 = vmul.f32 1.0, %v842
        %v844 = vrcp.pop %v618
        %v845 = vmul.f32 %v618, %v844
        %v846 = vsub.f32 1.0, %v845
        %v847 = vmul.f32 %v844, %v846
        %v848 = vadd.f32 %v844, %v847
        %vm849 = vweird.f32 %v618
        %vm850 = vweird.f32 %v844
        %vm851 = vmor %vm849, %vm850
        %v852 = vsel %vm851, %v844, %v848
        %v853 = vand.u32 2147483647, %v618
        %vm854 = vcmp.eq.f32.partialorder %v853, 8.507059e+37
        %v855 = vand.u32 %v618, 2147483648
        %v856 = vor.u32 1.1754944e-38, %v855
        %v857 = vsel %vm854, %v856, %v852
        %v858 = vmul.f32 1.0, %v857
        %v859 = vpack.c.bf16 %v648, %v633
        %v860 = vpack.c.bf16 %v678, %v663
        %v861 = vpack.c.bf16 %v708, %v693
        %v862 = vpack.c.bf16 %v738, %v723
        %v863 = vpack.c.bf16 %v768, %v753
        %v864 = vpack.c.bf16 %v798, %v783
        %v865 = vpack.c.bf16 %v828, %v813
        %v866 = vpack.c.bf16 %v858, %v843
        %v867 = vld [vmem:[%s3] sm:$0xff]
        %v868 = vld [vmem:[%s3 + $0x8] sm:$0xff]
        %v869 = vld [vmem:[%s3 + $0x10] sm:$0xff]
        %v870 = vld [vmem:[%s3 + $0x18] sm:$0xff]
        %v871 = vld [vmem:[%s3 + $0x20] sm:$0xff]
        %v872 = vld [vmem:[%s3 + $0x28] sm:$0xff]
        %v873 = vld [vmem:[%s3 + $0x30] sm:$0xff]
        %v874 = vld [vmem:[%s3 + $0x38] sm:$0xff]
        %v875 = vld [vmem:[%s3 + $0x40] sm:$0xff]
        %v876 = vld [vmem:[%s3 + $0x48] sm:$0xff]
        %v877 = vld [vmem:[%s3 + $0x50] sm:$0xff]
        %v878 = vld [vmem:[%s3 + $0x58] sm:$0xff]
        %v879 = vld [vmem:[%s3 + $0x60] sm:$0xff]
        %v880 = vld [vmem:[%s3 + $0x68] sm:$0xff]
        %v881 = vld [vmem:[%s3 + $0x70] sm:$0xff]
        %v882 = vld [vmem:[%s3 + $0x78] sm:$0xff]
        %v883 = vld [vmem:[%s4] sm:$0x3]
        %v885 = vperm.slane %v883, 0
        %v886 = vperm.slane %v883, 1
        %v905 = vunpack.c.l.b16 %v867
        %v906 = vunpack.c.h.b16 %v867
        %v907 = vunpack.c.l.b16 %v868
        %v908 = vunpack.c.h.b16 %v868
        %v909 = vunpack.c.l.b16 %v869
        %v910 = vunpack.c.h.b16 %v869
        %v911 = vunpack.c.l.b16 %v870
        %v912 = vunpack.c.h.b16 %v870
        %v913 = vunpack.c.l.b16 %v871
        %v914 = vunpack.c.h.b16 %v871
        %v915 = vunpack.c.l.b16 %v872
        %v916 = vunpack.c.h.b16 %v872
        %v917 = vunpack.c.l.b16 %v873
        %v918 = vunpack.c.h.b16 %v873
        %v919 = vunpack.c.l.b16 %v874
        %v920 = vunpack.c.h.b16 %v874
        %v921 = vunpack.c.l.b16 %v875
        %v922 = vunpack.c.h.b16 %v875
        %v923 = vunpack.c.l.b16 %v876
        %v924 = vunpack.c.h.b16 %v876
        %v925 = vunpack.c.l.b16 %v877
        %v926 = vunpack.c.h.b16 %v877
        %v927 = vunpack.c.l.b16 %v878
        %v928 = vunpack.c.h.b16 %v878
        %v929 = vunpack.c.l.b16 %v879
        %v930 = vunpack.c.h.b16 %v879
        %v931 = vunpack.c.l.b16 %v880
        %v932 = vunpack.c.h.b16 %v880
        %v933 = vunpack.c.l.b16 %v881
        %v934 = vunpack.c.h.b16 %v881
        %v935 = vunpack.c.l.b16 %v882
        %v936 = vunpack.c.h.b16 %v882
        %v937 = vpack.c.b16 %v907, %v905
        %v938 = vpack.c.b16 %v908, %v906
        %v939 = vpack.c.b16 %v911, %v909
        %v940 = vpack.c.b16 %v912, %v910
        %v941 = vpack.c.b16 %v915, %v913
        %v942 = vpack.c.b16 %v916, %v914
        %v943 = vpack.c.b16 %v919, %v917
        %v944 = vpack.c.b16 %v920, %v918
        %v945 = vpack.c.b16 %v923, %v921
        %v946 = vpack.c.b16 %v924, %v922
        %v947 = vpack.c.b16 %v927, %v925
        %v948 = vpack.c.b16 %v928, %v926
        %v949 = vpack.c.b16 %v931, %v929
        %v950 = vpack.c.b16 %v932, %v930
        %v951 = vpack.c.b16 %v935, %v933
        %v952 = vpack.c.b16 %v936, %v934
        %969 = vmatpush.bf16.msra.mxu0 %v951
        %970 = vmatpush.bf16.msra.mxu0 %v949
        %971 = vmatpush.bf16.msra.mxu0 %v947
        %972 = vmatpush.bf16.msra.mxu0 %v945
        %973 = vmatpush.bf16.msra.mxu0 %v943
        %974 = vmatpush.bf16.msra.mxu0 %v941
        %975 = vmatpush.bf16.msra.mxu0 %v939
        %976 = vmatpush.bf16.msra.mxu0 %v937
        %977 = vmatmul.bf16.gmra.mxu0 %v859
        %v978 = vpop.f32.mrf.mxu0
        %v979 = vadd.f32 %v885, %v978
        %v980 = vpop.f32.mrf.mxu0
        %v981 = vadd.f32 %v885, %v980
        %982 = vmatmul.bf16.gmra.mxu0 %v860
        %v983 = vpop.f32.mrf.mxu0
        %v984 = vadd.f32 %v885, %v983
        %v985 = vpop.f32.mrf.mxu0
        %v986 = vadd.f32 %v885, %v985
        %987 = vmatmul.bf16.gmra.mxu0 %v861
        %v988 = vpop.f32.mrf.mxu0
        %v989 = vadd.f32 %v885, %v988
        %v990 = vpop.f32.mrf.mxu0
        %v991 = vadd.f32 %v885, %v990
        %992 = vmatmul.bf16.gmra.mxu0 %v862
        %v993 = vpop.f32.mrf.mxu0
        %v994 = vadd.f32 %v885, %v993
        %v995 = vpop.f32.mrf.mxu0
        %v996 = vadd.f32 %v885, %v995
        %997 = vmatmul.bf16.gmra.mxu0 %v863
        %v998 = vpop.f32.mrf.mxu0
        %v999 = vadd.f32 %v885, %v998
        %v1000 = vpop.f32.mrf.mxu0
        %v1001 = vadd.f32 %v885, %v1000
        %1002 = vmatmul.bf16.gmra.mxu0 %v864
        %v1003 = vpop.f32.mrf.mxu0
        %v1004 = vadd.f32 %v885, %v1003
        %v1005 = vpop.f32.mrf.mxu0
        %v1006 = vadd.f32 %v885, %v1005
        %1007 = vmatmul.bf16.gmra.mxu0 %v865
        %v1008 = vpop.f32.mrf.mxu0
        %v1009 = vadd.f32 %v885, %v1008
        %v1010 = vpop.f32.mrf.mxu0
        %v1011 = vadd.f32 %v885, %v1010
        %1012 = vmatmul.bf16.gmra.mxu0 %v866
        %v1013 = vpop.f32.mrf.mxu0
        %v1014 = vadd.f32 %v885, %v1013
        %v1015 = vpop.f32.mrf.mxu0
        %v1016 = vadd.f32 %v885, %v1015
        %1017 = vdwg.mxu0
        %1018 = vmatpush.bf16.msra.mxu0 %v952
        %1019 = vmatpush.bf16.msra.mxu0 %v950
        %1020 = vmatpush.bf16.msra.mxu0 %v948
        %1021 = vmatpush.bf16.msra.mxu0 %v946
        %1022 = vmatpush.bf16.msra.mxu0 %v944
        %1023 = vmatpush.bf16.msra.mxu0 %v942
        %1024 = vmatpush.bf16.msra.mxu0 %v940
        %1025 = vmatpush.bf16.msra.mxu0 %v938
        %1026 = vmatmul.bf16.gmra.mxu0 %v859
        %v1027 = vpop.f32.mrf.mxu0
        %v1028 = vadd.f32 %v886, %v1027
        %v1029 = vpop.f32.mrf.mxu0
        %v1030 = vadd.f32 %v886, %v1029
        %1031 = vmatmul.bf16.gmra.mxu0 %v860
        %v1032 = vpop.f32.mrf.mxu0
        %v1033 = vadd.f32 %v886, %v1032
        %v1034 = vpop.f32.mrf.mxu0
        %v1035 = vadd.f32 %v886, %v1034
        %1036 = vmatmul.bf16.gmra.mxu0 %v861
        %v1037 = vpop.f32.mrf.mxu0
        %v1038 = vadd.f32 %v886, %v1037
        %v1039 = vpop.f32.mrf.mxu0
        %v1040 = vadd.f32 %v886, %v1039
        %1041 = vmatmul.bf16.gmra.mxu0 %v862
        %v1042 = vpop.f32.mrf.mxu0
        %v1043 = vadd.f32 %v886, %v1042
        %v1044 = vpop.f32.mrf.mxu0
        %v1045 = vadd.f32 %v886, %v1044
        %1046 = vmatmul.bf16.gmra.mxu0 %v863
        %v1047 = vpop.f32.mrf.mxu0
        %v1048 = vadd.f32 %v886, %v1047
        %v1049 = vpop.f32.mrf.mxu0
        %v1050 = vadd.f32 %v886, %v1049
        %1051 = vmatmul.bf16.gmra.mxu0 %v864
        %v1052 = vpop.f32.mrf.mxu0
        %v1053 = vadd.f32 %v886, %v1052
        %v1054 = vpop.f32.mrf.mxu0
        %v1055 = vadd.f32 %v886, %v1054
        %1056 = vmatmul.bf16.gmra.mxu0 %v865
        %v1057 = vpop.f32.mrf.mxu0
        %v1058 = vadd.f32 %v886, %v1057
        %v1059 = vpop.f32.mrf.mxu0
        %v1060 = vadd.f32 %v886, %v1059
        %1061 = vmatmul.bf16.gmra.mxu0 %v866
        %v1062 = vpop.f32.mrf.mxu0
        %v1063 = vadd.f32 %v886, %v1062
        %v1064 = vpop.f32.mrf.mxu0
        %v1065 = vadd.f32 %v886, %v1064
        %1066 = vdwg.mxu0
        %v1067 = vxor.u32 %v979, 2147483648
        %v1068 = vxor.u32 %v1028, 2147483648
        %v1069 = vxor.u32 %v981, 2147483648
        %v1070 = vxor.u32 %v1030, 2147483648
        %v1071 = vxor.u32 %v984, 2147483648
        %v1072 = vxor.u32 %v1033, 2147483648
        %v1073 = vxor.u32 %v986, 2147483648
        %v1074 = vxor.u32 %v1035, 2147483648
        %v1075 = vxor.u32 %v989, 2147483648
        %v1076 = vxor.u32 %v1038, 2147483648
        %v1077 = vxor.u32 %v991, 2147483648
        %v1078 = vxor.u32 %v1040, 2147483648
        %v1079 = vxor.u32 %v994, 2147483648
        %v1080 = vxor.u32 %v1043, 2147483648
        %v1081 = vxor.u32 %v996, 2147483648
        %v1082 = vxor.u32 %v1045, 2147483648
        %v1083 = vxor.u32 %v999, 2147483648
        %v1084 = vxor.u32 %v1048, 2147483648
        %v1085 = vxor.u32 %v1001, 2147483648
        %v1086 = vxor.u32 %v1050, 2147483648
        %v1087 = vxor.u32 %v1004, 2147483648
        %v1088 = vxor.u32 %v1053, 2147483648
        %v1089 = vxor.u32 %v1006, 2147483648
        %v1090 = vxor.u32 %v1055, 2147483648
        %v1091 = vxor.u32 %v1009, 2147483648
        %v1092 = vxor.u32 %v1058, 2147483648
        %v1093 = vxor.u32 %v1011, 2147483648
        %v1094 = vxor.u32 %v1060, 2147483648
        %v1095 = vxor.u32 %v1014, 2147483648
        %v1096 = vxor.u32 %v1063, 2147483648
        %v1097 = vxor.u32 %v1016, 2147483648
        %v1098 = vxor.u32 %v1065, 2147483648
        %v1099 = vmul.f32 %v1067, 1.442695
        %v1100 = vpow.pop %v1099
        %v1101 = vmul.f32 %v1068, 1.442695
        %v1102 = vpow.pop %v1101
        %v1103 = vmul.f32 %v1069, 1.442695
        %v1104 = vpow.pop %v1103
        %v1105 = vmul.f32 %v1070, 1.442695
        %v1106 = vpow.pop %v1105
        %v1107 = vmul.f32 %v1071, 1.442695
        %v1108 = vpow.pop %v1107
        %v1109 = vmul.f32 %v1072, 1.442695
        %v1110 = vpow.pop %v1109
        %v1111 = vmul.f32 %v1073, 1.442695
        %v1112 = vpow.pop %v1111
        %v1113 = vmul.f32 %v1074, 1.442695
        %v1114 = vpow.pop %v1113
        %v1115 = vmul.f32 %v1075, 1.442695
        %v1116 = vpow.pop %v1115
        %v1117 = vmul.f32 %v1076, 1.442695
        %v1118 = vpow.pop %v1117
        %v1119 = vmul.f32 %v1077, 1.442695
        %v1120 = vpow.pop %v1119
        %v1121 = vmul.f32 %v1078, 1.442695
        %v1122 = vpow.pop %v1121
        %v1123 = vmul.f32 %v1079, 1.442695
        %v1124 = vpow.pop %v1123
        %v1125 = vmul.f32 %v1080, 1.442695
        %v1126 = vpow.pop %v1125
        %v1127 = vmul.f32 %v1081, 1.442695
        %v1128 = vpow.pop %v1127
        %v1129 = vmul.f32 %v1082, 1.442695
        %v1130 = vpow.pop %v1129
        %v1131 = vmul.f32 %v1083, 1.442695
        %v1132 = vpow.pop %v1131
        %v1133 = vmul.f32 %v1084, 1.442695
        %v1134 = vpow.pop %v1133
        %v1135 = vmul.f32 %v1085, 1.442695
        %v1136 = vpow.pop %v1135
        %v1137 = vmul.f32 %v1086, 1.442695
        %v1138 = vpow.pop %v1137
        %v1139 = vmul.f32 %v1087, 1.442695
        %v1140 = vpow.pop %v1139
        %v1141 = vmul.f32 %v1088, 1.442695
        %v1142 = vpow.pop %v1141
        %v1143 = vmul.f32 %v1089, 1.442695
        %v1144 = vpow.pop %v1143
        %v1145 = vmul.f32 %v1090, 1.442695
        %v1146 = vpow.pop %v1145
        %v1147 = vmul.f32 %v1091, 1.442695
        %v1148 = vpow.pop %v1147
        %v1149 = vmul.f32 %v1092, 1.442695
        %v1150 = vpow.pop %v1149
        %v1151 = vmul.f32 %v1093, 1.442695
        %v1152 = vpow.pop %v1151
        %v1153 = vmul.f32 %v1094, 1.442695
        %v1154 = vpow.pop %v1153
        %v1155 = vmul.f32 %v1095, 1.442695
        %v1156 = vpow.pop %v1155
        %v1157 = vmul.f32 %v1096, 1.442695
        %v1158 = vpow.pop %v1157
        %v1159 = vmul.f32 %v1097, 1.442695
        %v1160 = vpow.pop %v1159
        %v1161 = vmul.f32 %v1098, 1.442695
        %v1162 = vpow.pop %v1161
        %v1163 = vadd.f32 %v1100, 1.0
        %v1164 = vadd.f32 %v1102, 1.0
        %v1165 = vadd.f32 %v1104, 1.0
        %v1166 = vadd.f32 %v1106, 1.0
        %v1167 = vadd.f32 %v1108, 1.0
        %v1168 = vadd.f32 %v1110, 1.0
        %v1169 = vadd.f32 %v1112, 1.0
        %v1170 = vadd.f32 %v1114, 1.0
        %v1171 = vadd.f32 %v1116, 1.0
        %v1172 = vadd.f32 %v1118, 1.0
        %v1173 = vadd.f32 %v1120, 1.0
        %v1174 = vadd.f32 %v1122, 1.0
        %v1175 = vadd.f32 %v1124, 1.0
        %v1176 = vadd.f32 %v1126, 1.0
        %v1177 = vadd.f32 %v1128, 1.0
        %v1178 = vadd.f32 %v1130, 1.0
        %v1179 = vadd.f32 %v1132, 1.0
        %v1180 = vadd.f32 %v1134, 1.0
        %v1181 = vadd.f32 %v1136, 1.0
        %v1182 = vadd.f32 %v1138, 1.0
        %v1183 = vadd.f32 %v1140, 1.0
        %v1184 = vadd.f32 %v1142, 1.0
        %v1185 = vadd.f32 %v1144, 1.0
        %v1186 = vadd.f32 %v1146, 1.0
        %v1187 = vadd.f32 %v1148, 1.0
        %v1188 = vadd.f32 %v1150, 1.0
        %v1189 = vadd.f32 %v1152, 1.0
        %v1190 = vadd.f32 %v1154, 1.0
        %v1191 = vadd.f32 %v1156, 1.0
        %v1192 = vadd.f32 %v1158, 1.0
        %v1193 = vadd.f32 %v1160, 1.0
        %v1194 = vadd.f32 %v1162, 1.0
        %v1195 = vrcp.pop %v1163
        %v1196 = vmul.f32 %v1163, %v1195
        %v1197 = vsub.f32 1.0, %v1196
        %v1198 = vmul.f32 %v1195, %v1197
        %v1199 = vadd.f32 %v1195, %v1198
        %vm1200 = vweird.f32 %v1163
        %vm1201 = vweird.f32 %v1195
        %vm1202 = vmor %vm1200, %vm1201
        %v1203 = vsel %vm1202, %v1195, %v1199
        %v1204 = vand.u32 2147483647, %v1163
        %vm1205 = vcmp.eq.f32.partialorder %v1204, 8.507059e+37
        %v1206 = vand.u32 %v1163, 2147483648
        %v1207 = vor.u32 1.1754944e-38, %v1206
        %v1208 = vsel %vm1205, %v1207, %v1203
        %v1209 = vmul.f32 1.0, %v1208
        %v1210 = vrcp.pop %v1164
        %v1211 = vmul.f32 %v1164, %v1210
        %v1212 = vsub.f32 1.0, %v1211
        %v1213 = vmul.f32 %v1210, %v1212
        %v1214 = vadd.f32 %v1210, %v1213
        %vm1215 = vweird.f32 %v1164
        %vm1216 = vweird.f32 %v1210
        %vm1217 = vmor %vm1215, %vm1216
        %v1218 = vsel %vm1217, %v1210, %v1214
        %v1219 = vand.u32 2147483647, %v1164
        %vm1220 = vcmp.eq.f32.partialorder %v1219, 8.507059e+37
        %v1221 = vand.u32 %v1164, 2147483648
        %v1222 = vor.u32 1.1754944e-38, %v1221
        %v1223 = vsel %vm1220, %v1222, %v1218
        %v1224 = vmul.f32 1.0, %v1223
        %v1225 = vrcp.pop %v1165
        %v1226 = vmul.f32 %v1165, %v1225
        %v1227 = vsub.f32 1.0, %v1226
        %v1228 = vmul.f32 %v1225, %v1227
        %v1229 = vadd.f32 %v1225, %v1228
        %vm1230 = vweird.f32 %v1165
        %vm1231 = vweird.f32 %v1225
        %vm1232 = vmor %vm1230, %vm1231
        %v1233 = vsel %vm1232, %v1225, %v1229
        %v1234 = vand.u32 2147483647, %v1165
        %vm1235 = vcmp.eq.f32.partialorder %v1234, 8.507059e+37
        %v1236 = vand.u32 %v1165, 2147483648
        %v1237 = vor.u32 1.1754944e-38, %v1236
        %v1238 = vsel %vm1235, %v1237, %v1233
        %v1239 = vmul.f32 1.0, %v1238
        %v1240 = vrcp.pop %v1166
        %v1241 = vmul.f32 %v1166, %v1240
        %v1242 = vsub.f32 1.0, %v1241
        %v1243 = vmul.f32 %v1240, %v1242
        %v1244 = vadd.f32 %v1240, %v1243
        %vm1245 = vweird.f32 %v1166
        %vm1246 = vweird.f32 %v1240
        %vm1247 = vmor %vm1245, %vm1246
        %v1248 = vsel %vm1247, %v1240, %v1244
        %v1249 = vand.u32 2147483647, %v1166
        %vm1250 = vcmp.eq.f32.partialorder %v1249, 8.507059e+37
        %v1251 = vand.u32 %v1166, 2147483648
        %v1252 = vor.u32 1.1754944e-38, %v1251
        %v1253 = vsel %vm1250, %v1252, %v1248
        %v1254 = vmul.f32 1.0, %v1253
        %v1255 = vrcp.pop %v1167
        %v1256 = vmul.f32 %v1167, %v1255
        %v1257 = vsub.f32 1.0, %v1256
        %v1258 = vmul.f32 %v1255, %v1257
        %v1259 = vadd.f32 %v1255, %v1258
        %vm1260 = vweird.f32 %v1167
        %vm1261 = vweird.f32 %v1255
        %vm1262 = vmor %vm1260, %vm1261
        %v1263 = vsel %vm1262, %v1255, %v1259
        %v1264 = vand.u32 2147483647, %v1167
        %vm1265 = vcmp.eq.f32.partialorder %v1264, 8.507059e+37
        %v1266 = vand.u32 %v1167, 2147483648
        %v1267 = vor.u32 1.1754944e-38, %v1266
        %v1268 = vsel %vm1265, %v1267, %v1263
        %v1269 = vmul.f32 1.0, %v1268
        %v1270 = vrcp.pop %v1168
        %v1271 = vmul.f32 %v1168, %v1270
        %v1272 = vsub.f32 1.0, %v1271
        %v1273 = vmul.f32 %v1270, %v1272
        %v1274 = vadd.f32 %v1270, %v1273
        %vm1275 = vweird.f32 %v1168
        %vm1276 = vweird.f32 %v1270
        %vm1277 = vmor %vm1275, %vm1276
        %v1278 = vsel %vm1277, %v1270, %v1274
        %v1279 = vand.u32 2147483647, %v1168
        %vm1280 = vcmp.eq.f32.partialorder %v1279, 8.507059e+37
        %v1281 = vand.u32 %v1168, 2147483648
        %v1282 = vor.u32 1.1754944e-38, %v1281
        %v1283 = vsel %vm1280, %v1282, %v1278
        %v1284 = vmul.f32 1.0, %v1283
        %v1285 = vrcp.pop %v1169
        %v1286 = vmul.f32 %v1169, %v1285
        %v1287 = vsub.f32 1.0, %v1286
        %v1288 = vmul.f32 %v1285, %v1287
        %v1289 = vadd.f32 %v1285, %v1288
        %vm1290 = vweird.f32 %v1169
        %vm1291 = vweird.f32 %v1285
        %vm1292 = vmor %vm1290, %vm1291
        %v1293 = vsel %vm1292, %v1285, %v1289
        %v1294 = vand.u32 2147483647, %v1169
        %vm1295 = vcmp.eq.f32.partialorder %v1294, 8.507059e+37
        %v1296 = vand.u32 %v1169, 2147483648
        %v1297 = vor.u32 1.1754944e-38, %v1296
        %v1298 = vsel %vm1295, %v1297, %v1293
        %v1299 = vmul.f32 1.0, %v1298
        %v1300 = vrcp.pop %v1170
        %v1301 = vmul.f32 %v1170, %v1300
        %v1302 = vsub.f32 1.0, %v1301
        %v1303 = vmul.f32 %v1300, %v1302
        %v1304 = vadd.f32 %v1300, %v1303
        %vm1305 = vweird.f32 %v1170
        %vm1306 = vweird.f32 %v1300
        %vm1307 = vmor %vm1305, %vm1306
        %v1308 = vsel %vm1307, %v1300, %v1304
        %v1309 = vand.u32 2147483647, %v1170
        %vm1310 = vcmp.eq.f32.partialorder %v1309, 8.507059e+37
        %v1311 = vand.u32 %v1170, 2147483648
        %v1312 = vor.u32 1.1754944e-38, %v1311
        %v1313 = vsel %vm1310, %v1312, %v1308
        %v1314 = vmul.f32 1.0, %v1313
        %v1315 = vrcp.pop %v1171
        %v1316 = vmul.f32 %v1171, %v1315
        %v1317 = vsub.f32 1.0, %v1316
        %v1318 = vmul.f32 %v1315, %v1317
        %v1319 = vadd.f32 %v1315, %v1318
        %vm1320 = vweird.f32 %v1171
        %vm1321 = vweird.f32 %v1315
        %vm1322 = vmor %vm1320, %vm1321
        %v1323 = vsel %vm1322, %v1315, %v1319
        %v1324 = vand.u32 2147483647, %v1171
        %vm1325 = vcmp.eq.f32.partialorder %v1324, 8.507059e+37
        %v1326 = vand.u32 %v1171, 2147483648
        %v1327 = vor.u32 1.1754944e-38, %v1326
        %v1328 = vsel %vm1325, %v1327, %v1323
        %v1329 = vmul.f32 1.0, %v1328
        %v1330 = vrcp.pop %v1172
        %v1331 = vmul.f32 %v1172, %v1330
        %v1332 = vsub.f32 1.0, %v1331
        %v1333 = vmul.f32 %v1330, %v1332
        %v1334 = vadd.f32 %v1330, %v1333
        %vm1335 = vweird.f32 %v1172
        %vm1336 = vweird.f32 %v1330
        %vm1337 = vmor %vm1335, %vm1336
        %v1338 = vsel %vm1337, %v1330, %v1334
        %v1339 = vand.u32 2147483647, %v1172
        %vm1340 = vcmp.eq.f32.partialorder %v1339, 8.507059e+37
        %v1341 = vand.u32 %v1172, 2147483648
        %v1342 = vor.u32 1.1754944e-38, %v1341
        %v1343 = vsel %vm1340, %v1342, %v1338
        %v1344 = vmul.f32 1.0, %v1343
        %v1345 = vrcp.pop %v1173
        %v1346 = vmul.f32 %v1173, %v1345
        %v1347 = vsub.f32 1.0, %v1346
        %v1348 = vmul.f32 %v1345, %v1347
        %v1349 = vadd.f32 %v1345, %v1348
        %vm1350 = vweird.f32 %v1173
        %vm1351 = vweird.f32 %v1345
        %vm1352 = vmor %vm1350, %vm1351
        %v1353 = vsel %vm1352, %v1345, %v1349
        %v1354 = vand.u32 2147483647, %v1173
        %vm1355 = vcmp.eq.f32.partialorder %v1354, 8.507059e+37
        %v1356 = vand.u32 %v1173, 2147483648
        %v1357 = vor.u32 1.1754944e-38, %v1356
        %v1358 = vsel %vm1355, %v1357, %v1353
        %v1359 = vmul.f32 1.0, %v1358
        %v1360 = vrcp.pop %v1174
        %v1361 = vmul.f32 %v1174, %v1360
        %v1362 = vsub.f32 1.0, %v1361
        %v1363 = vmul.f32 %v1360, %v1362
        %v1364 = vadd.f32 %v1360, %v1363
        %vm1365 = vweird.f32 %v1174
        %vm1366 = vweird.f32 %v1360
        %vm1367 = vmor %vm1365, %vm1366
        %v1368 = vsel %vm1367, %v1360, %v1364
        %v1369 = vand.u32 2147483647, %v1174
        %vm1370 = vcmp.eq.f32.partialorder %v1369, 8.507059e+37
        %v1371 = vand.u32 %v1174, 2147483648
        %v1372 = vor.u32 1.1754944e-38, %v1371
        %v1373 = vsel %vm1370, %v1372, %v1368
        %v1374 = vmul.f32 1.0, %v1373
        %v1375 = vrcp.pop %v1175
        %v1376 = vmul.f32 %v1175, %v1375
        %v1377 = vsub.f32 1.0, %v1376
        %v1378 = vmul.f32 %v1375, %v1377
        %v1379 = vadd.f32 %v1375, %v1378
        %vm1380 = vweird.f32 %v1175
        %vm1381 = vweird.f32 %v1375
        %vm1382 = vmor %vm1380, %vm1381
        %v1383 = vsel %vm1382, %v1375, %v1379
        %v1384 = vand.u32 2147483647, %v1175
        %vm1385 = vcmp.eq.f32.partialorder %v1384, 8.507059e+37
        %v1386 = vand.u32 %v1175, 2147483648
        %v1387 = vor.u32 1.1754944e-38, %v1386
        %v1388 = vsel %vm1385, %v1387, %v1383
        %v1389 = vmul.f32 1.0, %v1388
        %v1390 = vrcp.pop %v1176
        %v1391 = vmul.f32 %v1176, %v1390
        %v1392 = vsub.f32 1.0, %v1391
        %v1393 = vmul.f32 %v1390, %v1392
        %v1394 = vadd.f32 %v1390, %v1393
        %vm1395 = vweird.f32 %v1176
        %vm1396 = vweird.f32 %v1390
        %vm1397 = vmor %vm1395, %vm1396
        %v1398 = vsel %vm1397, %v1390, %v1394
        %v1399 = vand.u32 2147483647, %v1176
        %vm1400 = vcmp.eq.f32.partialorder %v1399, 8.507059e+37
        %v1401 = vand.u32 %v1176, 2147483648
        %v1402 = vor.u32 1.1754944e-38, %v1401
        %v1403 = vsel %vm1400, %v1402, %v1398
        %v1404 = vmul.f32 1.0, %v1403
        %v1405 = vrcp.pop %v1177
        %v1406 = vmul.f32 %v1177, %v1405
        %v1407 = vsub.f32 1.0, %v1406
        %v1408 = vmul.f32 %v1405, %v1407
        %v1409 = vadd.f32 %v1405, %v1408
        %vm1410 = vweird.f32 %v1177
        %vm1411 = vweird.f32 %v1405
        %vm1412 = vmor %vm1410, %vm1411
        %v1413 = vsel %vm1412, %v1405, %v1409
        %v1414 = vand.u32 2147483647, %v1177
        %vm1415 = vcmp.eq.f32.partialorder %v1414, 8.507059e+37
        %v1416 = vand.u32 %v1177, 2147483648
        %v1417 = vor.u32 1.1754944e-38, %v1416
        %v1418 = vsel %vm1415, %v1417, %v1413
        %v1419 = vmul.f32 1.0, %v1418
        %v1420 = vrcp.pop %v1178
        %v1421 = vmul.f32 %v1178, %v1420
        %v1422 = vsub.f32 1.0, %v1421
        %v1423 = vmul.f32 %v1420, %v1422
        %v1424 = vadd.f32 %v1420, %v1423
        %vm1425 = vweird.f32 %v1178
        %vm1426 = vweird.f32 %v1420
        %vm1427 = vmor %vm1425, %vm1426
        %v1428 = vsel %vm1427, %v1420, %v1424
        %v1429 = vand.u32 2147483647, %v1178
        %vm1430 = vcmp.eq.f32.partialorder %v1429, 8.507059e+37
        %v1431 = vand.u32 %v1178, 2147483648
        %v1432 = vor.u32 1.1754944e-38, %v1431
        %v1433 = vsel %vm1430, %v1432, %v1428
        %v1434 = vmul.f32 1.0, %v1433
        %v1435 = vrcp.pop %v1179
        %v1436 = vmul.f32 %v1179, %v1435
        %v1437 = vsub.f32 1.0, %v1436
        %v1438 = vmul.f32 %v1435, %v1437
        %v1439 = vadd.f32 %v1435, %v1438
        %vm1440 = vweird.f32 %v1179
        %vm1441 = vweird.f32 %v1435
        %vm1442 = vmor %vm1440, %vm1441
        %v1443 = vsel %vm1442, %v1435, %v1439
        %v1444 = vand.u32 2147483647, %v1179
        %vm1445 = vcmp.eq.f32.partialorder %v1444, 8.507059e+37
        %v1446 = vand.u32 %v1179, 2147483648
        %v1447 = vor.u32 1.1754944e-38, %v1446
        %v1448 = vsel %vm1445, %v1447, %v1443
        %v1449 = vmul.f32 1.0, %v1448
        %v1450 = vrcp.pop %v1180
        %v1451 = vmul.f32 %v1180, %v1450
        %v1452 = vsub.f32 1.0, %v1451
        %v1453 = vmul.f32 %v1450, %v1452
        %v1454 = vadd.f32 %v1450, %v1453
        %vm1455 = vweird.f32 %v1180
        %vm1456 = vweird.f32 %v1450
        %vm1457 = vmor %vm1455, %vm1456
        %v1458 = vsel %vm1457, %v1450, %v1454
        %v1459 = vand.u32 2147483647, %v1180
        %vm1460 = vcmp.eq.f32.partialorder %v1459, 8.507059e+37
        %v1461 = vand.u32 %v1180, 2147483648
        %v1462 = vor.u32 1.1754944e-38, %v1461
        %v1463 = vsel %vm1460, %v1462, %v1458
        %v1464 = vmul.f32 1.0, %v1463
        %v1465 = vrcp.pop %v1181
        %v1466 = vmul.f32 %v1181, %v1465
        %v1467 = vsub.f32 1.0, %v1466
        %v1468 = vmul.f32 %v1465, %v1467
        %v1469 = vadd.f32 %v1465, %v1468
        %vm1470 = vweird.f32 %v1181
        %vm1471 = vweird.f32 %v1465
        %vm1472 = vmor %vm1470, %vm1471
        %v1473 = vsel %vm1472, %v1465, %v1469
        %v1474 = vand.u32 2147483647, %v1181
        %vm1475 = vcmp.eq.f32.partialorder %v1474, 8.507059e+37
        %v1476 = vand.u32 %v1181, 2147483648
        %v1477 = vor.u32 1.1754944e-38, %v1476
        %v1478 = vsel %vm1475, %v1477, %v1473
        %v1479 = vmul.f32 1.0, %v1478
        %v1480 = vrcp.pop %v1182
        %v1481 = vmul.f32 %v1182, %v1480
        %v1482 = vsub.f32 1.0, %v1481
        %v1483 = vmul.f32 %v1480, %v1482
        %v1484 = vadd.f32 %v1480, %v1483
        %vm1485 = vweird.f32 %v1182
        %vm1486 = vweird.f32 %v1480
        %vm1487 = vmor %vm1485, %vm1486
        %v1488 = vsel %vm1487, %v1480, %v1484
        %v1489 = vand.u32 2147483647, %v1182
        %vm1490 = vcmp.eq.f32.partialorder %v1489, 8.507059e+37
        %v1491 = vand.u32 %v1182, 2147483648
        %v1492 = vor.u32 1.1754944e-38, %v1491
        %v1493 = vsel %vm1490, %v1492, %v1488
        %v1494 = vmul.f32 1.0, %v1493
        %v1495 = vrcp.pop %v1183
        %v1496 = vmul.f32 %v1183, %v1495
        %v1497 = vsub.f32 1.0, %v1496
        %v1498 = vmul.f32 %v1495, %v1497
        %v1499 = vadd.f32 %v1495, %v1498
        %vm1500 = vweird.f32 %v1183
        %vm1501 = vweird.f32 %v1495
        %vm1502 = vmor %vm1500, %vm1501
        %v1503 = vsel %vm1502, %v1495, %v1499
        %v1504 = vand.u32 2147483647, %v1183
        %vm1505 = vcmp.eq.f32.partialorder %v1504, 8.507059e+37
        %v1506 = vand.u32 %v1183, 2147483648
        %v1507 = vor.u32 1.1754944e-38, %v1506
        %v1508 = vsel %vm1505, %v1507, %v1503
        %v1509 = vmul.f32 1.0, %v1508
        %v1510 = vrcp.pop %v1184
        %v1511 = vmul.f32 %v1184, %v1510
        %v1512 = vsub.f32 1.0, %v1511
        %v1513 = vmul.f32 %v1510, %v1512
        %v1514 = vadd.f32 %v1510, %v1513
        %vm1515 = vweird.f32 %v1184
        %vm1516 = vweird.f32 %v1510
        %vm1517 = vmor %vm1515, %vm1516
        %v1518 = vsel %vm1517, %v1510, %v1514
        %v1519 = vand.u32 2147483647, %v1184
        %vm1520 = vcmp.eq.f32.partialorder %v1519, 8.507059e+37
        %v1521 = vand.u32 %v1184, 2147483648
        %v1522 = vor.u32 1.1754944e-38, %v1521
        %v1523 = vsel %vm1520, %v1522, %v1518
        %v1524 = vmul.f32 1.0, %v1523
        %v1525 = vrcp.pop %v1185
        %v1526 = vmul.f32 %v1185, %v1525
        %v1527 = vsub.f32 1.0, %v1526
        %v1528 = vmul.f32 %v1525, %v1527
        %v1529 = vadd.f32 %v1525, %v1528
        %vm1530 = vweird.f32 %v1185
        %vm1531 = vweird.f32 %v1525
        %vm1532 = vmor %vm1530, %vm1531
        %v1533 = vsel %vm1532, %v1525, %v1529
        %v1534 = vand.u32 2147483647, %v1185
        %vm1535 = vcmp.eq.f32.partialorder %v1534, 8.507059e+37
        %v1536 = vand.u32 %v1185, 2147483648
        %v1537 = vor.u32 1.1754944e-38, %v1536
        %v1538 = vsel %vm1535, %v1537, %v1533
        %v1539 = vmul.f32 1.0, %v1538
        %v1540 = vrcp.pop %v1186
        %v1541 = vmul.f32 %v1186, %v1540
        %v1542 = vsub.f32 1.0, %v1541
        %v1543 = vmul.f32 %v1540, %v1542
        %v1544 = vadd.f32 %v1540, %v1543
        %vm1545 = vweird.f32 %v1186
        %vm1546 = vweird.f32 %v1540
        %vm1547 = vmor %vm1545, %vm1546
        %v1548 = vsel %vm1547, %v1540, %v1544
        %v1549 = vand.u32 2147483647, %v1186
        %vm1550 = vcmp.eq.f32.partialorder %v1549, 8.507059e+37
        %v1551 = vand.u32 %v1186, 2147483648
        %v1552 = vor.u32 1.1754944e-38, %v1551
        %v1553 = vsel %vm1550, %v1552, %v1548
        %v1554 = vmul.f32 1.0, %v1553
        %v1555 = vrcp.pop %v1187
        %v1556 = vmul.f32 %v1187, %v1555
        %v1557 = vsub.f32 1.0, %v1556
        %v1558 = vmul.f32 %v1555, %v1557
        %v1559 = vadd.f32 %v1555, %v1558
        %vm1560 = vweird.f32 %v1187
        %vm1561 = vweird.f32 %v1555
        %vm1562 = vmor %vm1560, %vm1561
        %v1563 = vsel %vm1562, %v1555, %v1559
        %v1564 = vand.u32 2147483647, %v1187
        %vm1565 = vcmp.eq.f32.partialorder %v1564, 8.507059e+37
        %v1566 = vand.u32 %v1187, 2147483648
        %v1567 = vor.u32 1.1754944e-38, %v1566
        %v1568 = vsel %vm1565, %v1567, %v1563
        %v1569 = vmul.f32 1.0, %v1568
        %v1570 = vrcp.pop %v1188
        %v1571 = vmul.f32 %v1188, %v1570
        %v1572 = vsub.f32 1.0, %v1571
        %v1573 = vmul.f32 %v1570, %v1572
        %v1574 = vadd.f32 %v1570, %v1573
        %vm1575 = vweird.f32 %v1188
        %vm1576 = vweird.f32 %v1570
        %vm1577 = vmor %vm1575, %vm1576
        %v1578 = vsel %vm1577, %v1570, %v1574
        %v1579 = vand.u32 2147483647, %v1188
        %vm1580 = vcmp.eq.f32.partialorder %v1579, 8.507059e+37
        %v1581 = vand.u32 %v1188, 2147483648
        %v1582 = vor.u32 1.1754944e-38, %v1581
        %v1583 = vsel %vm1580, %v1582, %v1578
        %v1584 = vmul.f32 1.0, %v1583
        %v1585 = vrcp.pop %v1189
        %v1586 = vmul.f32 %v1189, %v1585
        %v1587 = vsub.f32 1.0, %v1586
        %v1588 = vmul.f32 %v1585, %v1587
        %v1589 = vadd.f32 %v1585, %v1588
        %vm1590 = vweird.f32 %v1189
        %vm1591 = vweird.f32 %v1585
        %vm1592 = vmor %vm1590, %vm1591
        %v1593 = vsel %vm1592, %v1585, %v1589
        %v1594 = vand.u32 2147483647, %v1189
        %vm1595 = vcmp.eq.f32.partialorder %v1594, 8.507059e+37
        %v1596 = vand.u32 %v1189, 2147483648
        %v1597 = vor.u32 1.1754944e-38, %v1596
        %v1598 = vsel %vm1595, %v1597, %v1593
        %v1599 = vmul.f32 1.0, %v1598
        %v1600 = vrcp.pop %v1190
        %v1601 = vmul.f32 %v1190, %v1600
        %v1602 = vsub.f32 1.0, %v1601
        %v1603 = vmul.f32 %v1600, %v1602
        %v1604 = vadd.f32 %v1600, %v1603
        %vm1605 = vweird.f32 %v1190
        %vm1606 = vweird.f32 %v1600
        %vm1607 = vmor %vm1605, %vm1606
        %v1608 = vsel %vm1607, %v1600, %v1604
        %v1609 = vand.u32 2147483647, %v1190
        %vm1610 = vcmp.eq.f32.partialorder %v1609, 8.507059e+37
        %v1611 = vand.u32 %v1190, 2147483648
        %v1612 = vor.u32 1.1754944e-38, %v1611
        %v1613 = vsel %vm1610, %v1612, %v1608
        %v1614 = vmul.f32 1.0, %v1613
        %v1615 = vrcp.pop %v1191
        %v1616 = vmul.f32 %v1191, %v1615
        %v1617 = vsub.f32 1.0, %v1616
        %v1618 = vmul.f32 %v1615, %v1617
        %v1619 = vadd.f32 %v1615, %v1618
        %vm1620 = vweird.f32 %v1191
        %vm1621 = vweird.f32 %v1615
        %vm1622 = vmor %vm1620, %vm1621
        %v1623 = vsel %vm1622, %v1615, %v1619
        %v1624 = vand.u32 2147483647, %v1191
        %vm1625 = vcmp.eq.f32.partialorder %v1624, 8.507059e+37
        %v1626 = vand.u32 %v1191, 2147483648
        %v1627 = vor.u32 1.1754944e-38, %v1626
        %v1628 = vsel %vm1625, %v1627, %v1623
        %v1629 = vmul.f32 1.0, %v1628
        %v1630 = vrcp.pop %v1192
        %v1631 = vmul.f32 %v1192, %v1630
        %v1632 = vsub.f32 1.0, %v1631
        %v1633 = vmul.f32 %v1630, %v1632
        %v1634 = vadd.f32 %v1630, %v1633
        %vm1635 = vweird.f32 %v1192
        %vm1636 = vweird.f32 %v1630
        %vm1637 = vmor %vm1635, %vm1636
        %v1638 = vsel %vm1637, %v1630, %v1634
        %v1639 = vand.u32 2147483647, %v1192
        %vm1640 = vcmp.eq.f32.partialorder %v1639, 8.507059e+37
        %v1641 = vand.u32 %v1192, 2147483648
        %v1642 = vor.u32 1.1754944e-38, %v1641
        %v1643 = vsel %vm1640, %v1642, %v1638
        %v1644 = vmul.f32 1.0, %v1643
        %v1645 = vrcp.pop %v1193
        %v1646 = vmul.f32 %v1193, %v1645
        %v1647 = vsub.f32 1.0, %v1646
        %v1648 = vmul.f32 %v1645, %v1647
        %v1649 = vadd.f32 %v1645, %v1648
        %vm1650 = vweird.f32 %v1193
        %vm1651 = vweird.f32 %v1645
        %vm1652 = vmor %vm1650, %vm1651
        %v1653 = vsel %vm1652, %v1645, %v1649
        %v1654 = vand.u32 2147483647, %v1193
        %vm1655 = vcmp.eq.f32.partialorder %v1654, 8.507059e+37
        %v1656 = vand.u32 %v1193, 2147483648
        %v1657 = vor.u32 1.1754944e-38, %v1656
        %v1658 = vsel %vm1655, %v1657, %v1653
        %v1659 = vmul.f32 1.0, %v1658
        %v1660 = vrcp.pop %v1194
        %v1661 = vmul.f32 %v1194, %v1660
        %v1662 = vsub.f32 1.0, %v1661
        %v1663 = vmul.f32 %v1660, %v1662
        %v1664 = vadd.f32 %v1660, %v1663
        %vm1665 = vweird.f32 %v1194
        %vm1666 = vweird.f32 %v1660
        %vm1667 = vmor %vm1665, %vm1666
        %v1668 = vsel %vm1667, %v1660, %v1664
        %v1669 = vand.u32 2147483647, %v1194
        %vm1670 = vcmp.eq.f32.partialorder %v1669, 8.507059e+37
        %v1671 = vand.u32 %v1194, 2147483648
        %v1672 = vor.u32 1.1754944e-38, %v1671
        %v1673 = vsel %vm1670, %v1672, %v1668
        %v1674 = vmul.f32 1.0, %v1673
        %1675 = vst [vmem:[%s220] sm:$0xff] %v1209
        %1676 = vst [vmem:[%s220 + $0x8] sm:$0xff] %v1224
        %1677 = vst [vmem:[%s220 + $0x10] sm:$0xff] %v1239
        %1678 = vst [vmem:[%s220 + $0x18] sm:$0xff] %v1254
        %1679 = vst [vmem:[%s220 + $0x20] sm:$0xff] %v1269
        %1680 = vst [vmem:[%s220 + $0x28] sm:$0xff] %v1284
        %1681 = vst [vmem:[%s220 + $0x30] sm:$0xff] %v1299
        %1682 = vst [vmem:[%s220 + $0x38] sm:$0xff] %v1314
        %1683 = vst [vmem:[%s220 + $0x40] sm:$0xff] %v1329
        %1684 = vst [vmem:[%s220 + $0x48] sm:$0xff] %v1344
        %1685 = vst [vmem:[%s220 + $0x50] sm:$0xff] %v1359
        %1686 = vst [vmem:[%s220 + $0x58] sm:$0xff] %v1374
        %1687 = vst [vmem:[%s220 + $0x60] sm:$0xff] %v1389
        %1688 = vst [vmem:[%s220 + $0x68] sm:$0xff] %v1404
        %1689 = vst [vmem:[%s220 + $0x70] sm:$0xff] %v1419
        %1690 = vst [vmem:[%s220 + $0x78] sm:$0xff] %v1434
        %1691 = vst [vmem:[%s220 + $0x80] sm:$0xff] %v1449
        %1692 = vst [vmem:[%s220 + $0x88] sm:$0xff] %v1464
        %1693 = vst [vmem:[%s220 + $0x90] sm:$0xff] %v1479
        %1694 = vst [vmem:[%s220 + $0x98] sm:$0xff] %v1494
        %1695 = vst [vmem:[%s220 + $0xa0] sm:$0xff] %v1509
        %1696 = vst [vmem:[%s220 + $0xa8] sm:$0xff] %v1524
        %1697 = vst [vmem:[%s220 + $0xb0] sm:$0xff] %v1539
        %1698 = vst [vmem:[%s220 + $0xb8] sm:$0xff] %v1554
        %1699 = vst [vmem:[%s220 + $0xc0] sm:$0xff] %v1569
        %1700 = vst [vmem:[%s220 + $0xc8] sm:$0xff] %v1584
        %1701 = vst [vmem:[%s220 + $0xd0] sm:$0xff] %v1599
        %1702 = vst [vmem:[%s220 + $0xd8] sm:$0xff] %v1614
        %1703 = vst [vmem:[%s220 + $0xe0] sm:$0xff] %v1629
        %1704 = vst [vmem:[%s220 + $0xe8] sm:$0xff] %v1644
        %1705 = vst [vmem:[%s220 + $0xf0] sm:$0xff] %v1659
        %1706 = vst [vmem:[%s220 + $0xf8] sm:$0xff] %v1674
        %s1707 = sand.u32 %s137, 1
        %s1708 = scalar_lea.sflag [#allocation3], %s1707
        %s1709 = sand.u32 %s137, 1
        %s1710 = smul.addr %s1709, 256
        %s1711 = scalar_lea.vmem [#allocation2], %s1710
        // Predicated region
        $region41: #{autoencoder_forward.1} parent=39 // pred_check
          %p1712 = pneg %p147
        $region42: #{autoencoder_forward.1} parent=39 // pred_check_branch
          %1714 = sbr.rel (%p1712) target = $region44
        $region43: #{autoencoder_forward.1} parent=39 // pred_region
          %s1715 = smul.u32 16, %s19
          %1717 = vsyncadd %s1708, 0
          %s1718 = smul.addr %s1715, 2
          %s1719 = smul.addr %s1718, 8
          %s1720 = scalar_lea.hbm %s5, %s1719
          %s1721 = sshll.u32 %s1711, 4
          %s1722 = int_to_ptr.vmem [resolvable:$true] %s1721
          %s1723 = sshll.u32 %s1720, 4
          %s1724 = int_to_ptr.hbm [resolvable:$true] %s1723
          %1729 = dma.vmem_to_hbm [thread:$0]  %s1722, 4096, %s1724, %s1708, 256, 256, 16
        $region44: #{autoencoder_forward.1} parent=39 // pred_fallthru
          _
      $region40: #{autoencoder_forward.1} parent=5 // pred_fallthru
        _
      %p1730 = scmp.le.s32.totalorder 2, %s14
      // Predicated region
      $region45: #{autoencoder_forward.1} parent=5 // pred_check
        %p1731 = pneg %p1730
      $region46: #{autoencoder_forward.1} parent=5 // pred_check_branch
        %1733 = sbr.rel (%p1731) target = $region48
      $region47: #{autoencoder_forward.1} parent=5 // pred_region
        %s1734 = ssub.s32 %s14, 2
        // Predicated region
        $region49: #{autoencoder_forward.1} parent=47 // pred_check
          %p1735 = pneg %p153
        $region50: #{autoencoder_forward.1} parent=47 // pred_check_branch
          %1737 = sbr.rel (%p1735) target = $region52
        $region51: #{autoencoder_forward.1} parent=47 // pred_region
          %s1738 = sand.u32 %s138, 1
          %s1739 = scalar_lea.sflag [#allocation3], %s1738
          %s1740 = sand.u32 %s138, 1
          %s1741 = smul.addr %s1740, 256
          %s1742 = scalar_lea.vmem [#allocation2], %s1741
          %1744 = dma.done %s1739, 4096
        $region52: #{autoencoder_forward.1} parent=47 // pred_fallthru
          _
      $region48: #{autoencoder_forward.1} parent=5 // pred_fallthru
        _
    $region6: #{autoencoder_forward.1} parent=1 // loop_footer
      %s18 = sadd.s32 1, %s14
    $region7: #{autoencoder_forward.1} parent=1 // loop_footer_branch
      %13 = sbr.rel target = $region3
    $region8: #{autoencoder_forward.1} parent=1 // loop_exit
      _
    %1745 = vsyncpa [#allocation3], 1
    %s1746 = scalar_lea.sflag [#allocation3], 1
    %1747 = vsyncpa %s1746, 1

</llo_original>
